<compile_context>
chip_gen: v6e
topology: v6e:2x2x1
jax: 0.10.0
libtpu: 0.0.40
codegen_flags: <defaults>
</compile_context>

<pallas_src>
import functools

import jax
import jax.numpy as jnp
from jax.experimental import pallas as pl
from jax.experimental.pallas import tpu as pltpu

# logical sizes (from the PyTorch module)
D_IN, L2, L3, L4 = 350, 700, 450, 325
BN_EPS = 1e-5


def _rup(n, m):
    return (n + m - 1) // m * m


# lane-padded sizes (multiples of 128)
D_INP, L2P, L3P, L4P = _rup(D_IN, 128), _rup(L2, 128), _rup(L3, 128), _rup(L4, 128)

DEFAULT_TILE_B = 256
VMEM_LIMIT = 32 << 20


# --------------------------------------------------------------------------
# Pass 1: Linear->tanh->Linear->tanh->Linear per batch tile + partial BN stats
# --------------------------------------------------------------------------
def _fwd_stats_kernel(x_ref, w1_ref, b1_ref, w2_ref, b2_ref, w3_ref,
                      h3_ref, stats_ref, *, tile_b, batch):
    i = pl.program_id(0)

    x = x_ref[...]                                                    # (TB, D_INP) bf16
    h = jnp.dot(x, w1_ref[...], preferred_element_type=jnp.float32) + b1_ref[...]
    h = jnp.tanh(h)                                                   # (TB, L2P) f32
    h = jnp.dot(h.astype(jnp.bfloat16), w2_ref[...],
                preferred_element_type=jnp.float32) + b2_ref[...]
    h = jnp.tanh(h)                                                   # (TB, L3P) f32
    # fc3 bias intentionally dropped: it cancels exactly under training-mode BN.
    h3 = jnp.dot(h.astype(jnp.bfloat16), w3_ref[...],
                 preferred_element_type=jnp.float32)                  # (TB, L4P) f32
    h3_ref[...] = h3

    # per-tile partial statistics (mask out batch-padding rows, if any)
    if batch % tile_b == 0:
        h3m = h3
    else:
        rows = i * tile_b + jax.lax.broadcasted_iota(jnp.int32, h3.shape, 0)
        h3m = jnp.where(rows < batch, h3, 0.0)
    tile_sum = jnp.sum(h3m, axis=0, keepdims=True)                    # (1, L4P)
    tile_sq = jnp.sum(h3m * h3m, axis=0, keepdims=True)               # (1, L4P)
    stats_ref[...] = jnp.concatenate([tile_sum, tile_sq], axis=0)[None]


# --------------------------------------------------------------------------
# Pass 2: fused BN (FMA) -> tanh -> Linear(L4,1) as lane-reduce -> sigmoid
# --------------------------------------------------------------------------
def _bn_head_kernel(h3_ref, scale_ref, shift_ref, w4_ref, b4_ref, o_ref):
    h = h3_ref[...] * scale_ref[...] + shift_ref[...]                 # BN as one FMA
    h = jnp.tanh(h)                                                   # (TB, L4P) f32
    # N=1 output: VPU multiply + XLU lane reduce instead of a wasted MXU pass.
    logit = jnp.sum(h * w4_ref[...], axis=-1, keepdims=True) + b4_ref[0, 0]
    o_ref[...] = jax.nn.sigmoid(logit)                                # (TB, 1)


# --------------------------------------------------------------------------
# Wrapper
# --------------------------------------------------------------------------
def classifier_forward(x, params, *, tile_b=DEFAULT_TILE_B):
    """x: (B, 350) float32. params: unpadded weights (in,out) / biases (1,out)."""
    B = x.shape[0]

    def pad2(a, r, c):
        return jnp.pad(a, ((0, r - a.shape[0]), (0, c - a.shape[1])))

    # zero-pad feature dims to lane multiples; cast MXU operands to bf16
    w1 = pad2(params["w1"], D_INP, L2P).astype(jnp.bfloat16)
    w2 = pad2(params["w2"], L2P, L3P).astype(jnp.bfloat16)
    w3 = pad2(params["w3"], L3P, L4P).astype(jnp.bfloat16)
    b1 = pad2(params["b1"], 1, L2P)
    b2 = pad2(params["b2"], 1, L3P)
    gamma = pad2(params["gamma"], 1, L4P)                 # padded lanes -> 0
    beta = pad2(params["beta"], 1, L4P)
    w4_row = pad2(params["w4"].T, 1, L4P)                 # (1, L4P), padded rows -> 0
    b4 = params["b4"].reshape(1, 1)

    tb = min(tile_b, _rup(B, 8))
    bp = _rup(B, tb)
    n_tiles = bp // tb

    xp = jnp.pad(x, ((0, bp - B), (0, D_INP - D_IN))).astype(jnp.bfloat16)

    def resident(shape):
        return pl.BlockSpec(shape, lambda i: (0, 0))

    # ---- pass 1: layers 1-3 per batch tile + per-tile partial BN stats ----
    h3, part_stats = pl.pallas_call(
        functools.partial(_fwd_stats_kernel, tile_b=tb, batch=B),
        out_shape=(jax.ShapeDtypeStruct((bp, L4P), jnp.float32),
                   jax.ShapeDtypeStruct((n_tiles, 2, L4P), jnp.float32)),
        grid=(n_tiles,),
        in_specs=[pl.BlockSpec((tb, D_INP), lambda i: (i, 0)),
                  resident((D_INP, L2P)), resident((1, L2P)),
                  resident((L2P, L3P)), resident((1, L3P)),
                  resident((L3P, L4P))],
        out_specs=(pl.BlockSpec((tb, L4P), lambda i: (i, 0)),
                   pl.BlockSpec((1, 2, L4P), lambda i: (i, 0, 0))),
        compiler_params=pltpu.CompilerParams(
            dimension_semantics=("parallel",),
            vmem_limit_bytes=VMEM_LIMIT),
    )(xp, w1, b1, w2, b2, w3)

    # ---- finalize global batch statistics (tiny) and fold BN into scale/shift ----
    stats = jnp.sum(part_stats, axis=0)                   # (2, L4P)
    mean = stats[0] / B
    var = jnp.maximum(stats[1] / B - mean * mean, 0.0)    # biased (training-mode) var
    scale = gamma * jax.lax.rsqrt(var + BN_EPS)           # (1, L4P); padded lanes -> 0
    shift = beta - mean * scale

    # ---- pass 2: BN + tanh + output head per batch tile ----
    out = pl.pallas_call(
        _bn_head_kernel,
        out_shape=jax.ShapeDtypeStruct((bp, 1), jnp.float32),
        grid=(n_tiles,),
        in_specs=[pl.BlockSpec((tb, L4P), lambda i: (i, 0)),
                  resident((1, L4P)), resident((1, L4P)), resident((1, L4P)),
                  pl.BlockSpec(memory_space=pltpu.MemorySpace.SMEM)],
        out_specs=pl.BlockSpec((tb, 1), lambda i: (i, 0)),
        compiler_params=pltpu.CompilerParams(
            dimension_semantics=("parallel",),
            vmem_limit_bytes=VMEM_LIMIT),
    )(h3, scale, shift, w4_row, b4)

    return out[:B]


# --------------------------------------------------------------------------
# Params / reference
# --------------------------------------------------------------------------
def init_params(key):
    """Mimics PyTorch nn.Linear default init: U(-1/sqrt(fan_in), +1/sqrt(fan_in))."""
    def linear(k, fan_in, fan_out):
        kw, kb = jax.random.split(k)
        bound = 1.0 / jnp.sqrt(float(fan_in))
        w = jax.random.uniform(kw, (fan_in, fan_out), jnp.float32, -bound, bound)
        b = jax.random.uniform(kb, (1, fan_out), jnp.float32, -bound, bound)
        return w, b

    k1, k2, k3, k4 = jax.random.split(key, 4)
    w1, b1 = linear(k1, D_IN, L2)
    w2, b2 = linear(k2, L2, L3)
    w3, b3 = linear(k3, L3, L4)
    w4, b4 = linear(k4, L4, 1)
    gamma = jnp.ones((1, L4), jnp.float32)    # BatchNorm1d default affine params
    beta = jnp.zeros((1, L4), jnp.float32)
    return dict(w1=w1, b1=b1, w2=w2, b2=b2, w3=w3, b3=b3,
                gamma=gamma, beta=beta, w4=w4, b4=b4)


def reference_forward(x, p):
    """Pure-JAX f32 reference (includes b3; the kernel drops it since it cancels in BN)."""
    h = jnp.tanh(x @ p["w1"] + p["b1"])
    h = jnp.tanh(h @ p["w2"] + p["b2"])
    h = h @ p["w3"] + p["b3"]
    mean = jnp.mean(h, axis=0, keepdims=True)
    var = jnp.mean((h - mean) ** 2, axis=0, keepdims=True)
    h = (h - mean) / jnp.sqrt(var + BN_EPS) * p["gamma"] + p["beta"]
    h = jnp.tanh(h)
    return jax.nn.sigmoid(h @ p["w4"] + p["b4"])


if __name__ == "__main__":
    key = jax.random.PRNGKey(0)
    kx, kp = jax.random.split(key)

    B = 8
    x = jax.random.uniform(kx, (B, D_IN), jnp.float32, 0.0, 1.0)
    params = init_params(kp)

    fwd = jax.jit(classifier_forward)
    out = jax.block_until_ready(fwd(x, params))

    ref = reference_forward(x, params)
    assert out.shape == (B, 1), out.shape
    # bf16 MXU operands -> compare to the f32 reference with a matching tolerance
    assert jnp.allclose(out, ref, atol=2e-2, rtol=2e-2), (out, ref)

    print("KERNEL_OK")
</pallas_src>

<mosaic_0001>
module attributes {stable_mosaic.version = 11 : i64} {
  func.func @_bn_head_kernel(%arg0: i32, %arg1: memref<8x384xf32, #tpu.memory_space<vmem>>, %arg2: memref<1x384xf32, #tpu.memory_space<vmem>>, %arg3: memref<1x384xf32, #tpu.memory_space<vmem>>, %arg4: memref<1x384xf32, #tpu.memory_space<vmem>>, %arg5: memref<1x1xf32, #tpu.memory_space<smem>>, %arg6: memref<8x1xf32, #tpu.memory_space<vmem>>) attributes {dimension_semantics = [#tpu.dimension_semantics<parallel>], iteration_bounds = array<i64: 1>, scalar_prefetch = 0 : i64, scratch_operands = 0 : i64, tpu.core_type = #tpu.core_type<tc>, window_params = [{transform_indices = @transform_0, window_bounds = array<i64: 8, 384>}, {pipeline_mode = #tpu.pipeline_mode<synchronous>, transform_indices = @transform_1, window_bounds = array<i64: 1, 384>}, {pipeline_mode = #tpu.pipeline_mode<synchronous>, transform_indices = @transform_2, window_bounds = array<i64: 1, 384>}, {pipeline_mode = #tpu.pipeline_mode<synchronous>, transform_indices = @transform_3, window_bounds = array<i64: 1, 384>}, {transform_indices = @transform_4, window_bounds = array<i64: 1, 1>}, {transform_indices = @transform_5, window_bounds = array<i64: 8, 1>}]} {
    %c0 = arith.constant 0 : index
    %c0_0 = arith.constant 0 : index
    %0 = vector.load %arg1[%c0, %c0_0] : memref<8x384xf32, #tpu.memory_space<vmem>>, vector<8x384xf32>
    %c0_1 = arith.constant 0 : index
    %c0_2 = arith.constant 0 : index
    %1 = vector.load %arg2[%c0_1, %c0_2] : memref<1x384xf32, #tpu.memory_space<vmem>>, vector<1x384xf32>
    %2 = vector.broadcast %1 : vector<1x384xf32> to vector<8x384xf32>
    %3 = arith.mulf %0, %2 : vector<8x384xf32>
    %c0_3 = arith.constant 0 : index
    %c0_4 = arith.constant 0 : index
    %4 = vector.load %arg3[%c0_3, %c0_4] : memref<1x384xf32, #tpu.memory_space<vmem>>, vector<1x384xf32>
    %5 = vector.broadcast %4 : vector<1x384xf32> to vector<8x384xf32>
    %6 = arith.addf %3, %5 : vector<8x384xf32>
    %7 = math.tanh %6 : vector<8x384xf32>
    %c0_5 = arith.constant 0 : index
    %c0_6 = arith.constant 0 : index
    %8 = vector.load %arg4[%c0_5, %c0_6] : memref<1x384xf32, #tpu.memory_space<vmem>>, vector<1x384xf32>
    %9 = vector.broadcast %8 : vector<1x384xf32> to vector<8x384xf32>
    %10 = arith.mulf %7, %9 : vector<8x384xf32>
    %cst = arith.constant dense<0.000000e+00> : vector<8xf32>
    %11 = vector.multi_reduction <add>, %10, %cst [1] : vector<8x384xf32> to vector<8xf32>
    %12 = vector.shape_cast %11 : vector<8xf32> to vector<8x1xf32>
    %c0_7 = arith.constant 0 : index
    %c0_8 = arith.constant 0 : index
    %13 = memref.load %arg5[%c0_7, %c0_8] : memref<1x1xf32, #tpu.memory_space<smem>>
    %14 = vector.broadcast %13 : f32 to vector<8x1xf32>
    %15 = arith.addf %12, %14 : vector<8x1xf32>
    %16 = arith.negf %15 : vector<8x1xf32>
    %17 = math.exp %16 : vector<8x1xf32>
    %cst_9 = arith.constant 1.000000e+00 : f32
    %18 = vector.broadcast %cst_9 : f32 to vector<8x1xf32>
    %19 = arith.addf %18, %17 : vector<8x1xf32>
    %20 = arith.divf %18, %19 : vector<8x1xf32>
    %c0_10 = arith.constant 0 : index
    %c0_11 = arith.constant 0 : index
    %21 = vector.load %arg6[%c0_10, %c0_11] : memref<8x1xf32, #tpu.memory_space<vmem>>, vector<8x1xf32>
    tpu.vector_store %arg6[%c0_10, %c0_11], %20 {strides = array<i32>} : memref<8x1xf32, #tpu.memory_space<vmem>>, vector<8x1xf32>,
    return
  }
  func.func @transform_0(%arg0: i32) -> (i32, i32) {
    %c0_i32 = arith.constant 0 : i32
    %c0_i32_0 = arith.constant 0 : i32
    return %arg0, %c0_i32 : i32, i32
  }
  func.func @transform_1(%arg0: i32) -> (i32, i32) {
    %c0_i32 = arith.constant 0 : i32
    %c0_i32_0 = arith.constant 0 : i32
    %c0_i32_1 = arith.constant 0 : i32
    return %c0_i32, %c0_i32_0 : i32, i32
  }
  func.func @transform_2(%arg0: i32) -> (i32, i32) {
    %c0_i32 = arith.constant 0 : i32
    %c0_i32_0 = arith.constant 0 : i32
    %c0_i32_1 = arith.constant 0 : i32
    return %c0_i32, %c0_i32_0 : i32, i32
  }
  func.func @transform_3(%arg0: i32) -> (i32, i32) {
    %c0_i32 = arith.constant 0 : i32
    %c0_i32_0 = arith.constant 0 : i32
    %c0_i32_1 = arith.constant 0 : i32
    return %c0_i32, %c0_i32_0 : i32, i32
  }
  func.func @transform_4(%arg0: i32) -> (i32, i32) {
    %c0_i32 = arith.constant 0 : i32
    %c0_i32_0 = arith.constant 0 : i32
    %c0_i32_1 = arith.constant 0 : i32
    return %c0_i32, %c0_i32_0 : i32, i32
  }
  func.func @transform_5(%arg0: i32) -> (i32, i32) {
    %c0_i32 = arith.constant 0 : i32
    %c0_i32_0 = arith.constant 0 : i32
    return %arg0, %c0_i32 : i32, i32
  }
}

module attributes {stable_mosaic.version = 11 : i64} {
  func.func @_fwd_stats_kernel(%arg0: i32, %arg1: memref<8x384xbf16, #tpu.memory_space<vmem>>, %arg2: memref<384x768xbf16, #tpu.memory_space<vmem>>, %arg3: memref<1x768xf32, #tpu.memory_space<vmem>>, %arg4: memref<768x512xbf16, #tpu.memory_space<vmem>>, %arg5: memref<1x512xf32, #tpu.memory_space<vmem>>, %arg6: memref<512x384xbf16, #tpu.memory_space<vmem>>, %arg7: memref<8x384xf32, #tpu.memory_space<vmem>>, %arg8: memref<1x2x384xf32, #tpu.memory_space<vmem>>) attributes {dimension_semantics = [#tpu.dimension_semantics<parallel>], iteration_bounds = array<i64: 1>, scalar_prefetch = 0 : i64, scratch_operands = 0 : i64, tpu.core_type = #tpu.core_type<tc>, window_params = [{transform_indices = @transform_0, window_bounds = array<i64: 8, 384>}, {pipeline_mode = #tpu.pipeline_mode<synchronous>, transform_indices = @transform_1, window_bounds = array<i64: 384, 768>}, {pipeline_mode = #tpu.pipeline_mode<synchronous>, transform_indices = @transform_2, window_bounds = array<i64: 1, 768>}, {pipeline_mode = #tpu.pipeline_mode<synchronous>, transform_indices = @transform_3, window_bounds = array<i64: 768, 512>}, {pipeline_mode = #tpu.pipeline_mode<synchronous>, transform_indices = @transform_4, window_bounds = array<i64: 1, 512>}, {pipeline_mode = #tpu.pipeline_mode<synchronous>, transform_indices = @transform_5, window_bounds = array<i64: 512, 384>}, {transform_indices = @transform_6, window_bounds = array<i64: 8, 384>}, {transform_indices = @transform_7, window_bounds = array<i64: 1, 2, 384>}]} {
    %c0 = arith.constant 0 : index
    %c0_0 = arith.constant 0 : index
    %0 = vector.load %arg1[%c0, %c0_0] : memref<8x384xbf16, #tpu.memory_space<vmem>>, vector<8x384xbf16>
    %c0_1 = arith.constant 0 : index
    %c0_2 = arith.constant 0 : index
    %1 = vector.load %arg2[%c0_1, %c0_2] : memref<384x768xbf16, #tpu.memory_space<vmem>>, vector<384x768xbf16>
    %cst = arith.constant dense<0.000000e+00> : vector<8x768xf32>
    %2 = tpu.matmul %0, %1, %cst {dimension_numbers = #tpu.dot_dimension_numbers<[1], [0], [0], [1], [0, 0, 1, 1], [], []>} : vector<8x384xbf16>, vector<384x768xbf16>, vector<8x768xf32> -> vector<8x768xf32>
    %c0_3 = arith.constant 0 : index
    %c0_4 = arith.constant 0 : index
    %3 = vector.load %arg3[%c0_3, %c0_4] : memref<1x768xf32, #tpu.memory_space<vmem>>, vector<1x768xf32>
    %4 = vector.broadcast %3 : vector<1x768xf32> to vector<8x768xf32>
    %5 = arith.addf %2, %4 : vector<8x768xf32>
    %6 = math.tanh %5 : vector<8x768xf32>
    %7 = arith.truncf %6 : vector<8x768xf32> to vector<8x768xbf16>
    %c0_5 = arith.constant 0 : index
    %c0_6 = arith.constant 0 : index
    %8 = vector.load %arg4[%c0_5, %c0_6] : memref<768x512xbf16, #tpu.memory_space<vmem>>, vector<768x512xbf16>
    %cst_7 = arith.constant dense<0.000000e+00> : vector<8x512xf32>
    %9 = tpu.matmul %7, %8, %cst_7 {dimension_numbers = #tpu.dot_dimension_numbers<[1], [0], [0], [1], [0, 0, 1, 1], [], []>} : vector<8x768xbf16>, vector<768x512xbf16>, vector<8x512xf32> -> vector<8x512xf32>
    %c0_8 = arith.constant 0 : index
    %c0_9 = arith.constant 0 : index
    %10 = vector.load %arg5[%c0_8, %c0_9] : memref<1x512xf32, #tpu.memory_space<vmem>>, vector<1x512xf32>
    %11 = vector.broadcast %10 : vector<1x512xf32> to vector<8x512xf32>
    %12 = arith.addf %9, %11 : vector<8x512xf32>
    %13 = math.tanh %12 : vector<8x512xf32>
    %14 = arith.truncf %13 : vector<8x512xf32> to vector<8x512xbf16>
    %c0_10 = arith.constant 0 : index
    %c0_11 = arith.constant 0 : index
    %15 = vector.load %arg6[%c0_10, %c0_11] : memref<512x384xbf16, #tpu.memory_space<vmem>>, vector<512x384xbf16>
    %cst_12 = arith.constant dense<0.000000e+00> : vector<8x384xf32>
    %16 = tpu.matmul %14, %15, %cst_12 {dimension_numbers = #tpu.dot_dimension_numbers<[1], [0], [0], [1], [0, 0, 1, 1], [], []>} : vector<8x512xbf16>, vector<512x384xbf16>, vector<8x384xf32> -> vector<8x384xf32>
    %c0_13 = arith.constant 0 : index
    %c0_14 = arith.constant 0 : index
    %17 = vector.load %arg7[%c0_13, %c0_14] : memref<8x384xf32, #tpu.memory_space<vmem>>, vector<8x384xf32>
    tpu.vector_store %arg7[%c0_13, %c0_14], %16 {strides = array<i32>} : memref<8x384xf32, #tpu.memory_space<vmem>>, vector<8x384xf32>,
    %cst_15 = arith.constant dense<0.000000e+00> : vector<384xf32>
    %18 = vector.multi_reduction <add>, %16, %cst_15 [0] : vector<8x384xf32> to vector<384xf32>
    %19 = vector.shape_cast %18 : vector<384xf32> to vector<1x384xf32>
    %20 = arith.mulf %16, %16 : vector<8x384xf32>
    %cst_16 = arith.constant dense<0.000000e+00> : vector<384xf32>
    %21 = vector.multi_reduction <add>, %20, %cst_16 [0] : vector<8x384xf32> to vector<384xf32>
    %22 = vector.shape_cast %21 : vector<384xf32> to vector<1x384xf32>
    %23 = tpu.concatenate %19, %22 in 0 : vector<1x384xf32>, vector<1x384xf32> -> vector<2x384xf32>
    %24 = vector.shape_cast %23 : vector<2x384xf32> to vector<1x2x384xf32>
    %c0_17 = arith.constant 0 : index
    %c0_18 = arith.constant 0 : index
    %c0_19 = arith.constant 0 : index
    %25 = vector.load %arg8[%c0_17, %c0_18, %c0_19] : memref<1x2x384xf32, #tpu.memory_space<vmem>>, vector<1x2x384xf32>
    tpu.vector_store %arg8[%c0_17, %c0_18, %c0_19], %24 {strides = array<i32>} : memref<1x2x384xf32, #tpu.memory_space<vmem>>, vector<1x2x384xf32>,
    return
  }
  func.func @transform_0(%arg0: i32) -> (i32, i32) {
    %c0_i32 = arith.constant 0 : i32
    %c0_i32_0 = arith.constant 0 : i32
    return %arg0, %c0_i32 : i32, i32
  }
  func.func @transform_1(%arg0: i32) -> (i32, i32) {
    %c0_i32 = arith.constant 0 : i32
    %c0_i32_0 = arith.constant 0 : i32
    %c0_i32_1 = arith.constant 0 : i32
    return %c0_i32, %c0_i32_0 : i32, i32
  }
  func.func @transform_2(%arg0: i32) -> (i32, i32) {
    %c0_i32 = arith.constant 0 : i32
    %c0_i32_0 = arith.constant 0 : i32
    %c0_i32_1 = arith.constant 0 : i32
    return %c0_i32, %c0_i32_0 : i32, i32
  }
  func.func @transform_3(%arg0: i32) -> (i32, i32) {
    %c0_i32 = arith.constant 0 : i32
    %c0_i32_0 = arith.constant 0 : i32
    %c0_i32_1 = arith.constant 0 : i32
    return %c0_i32, %c0_i32_0 : i32, i32
  }
  func.func @transform_4(%arg0: i32) -> (i32, i32) {
    %c0_i32 = arith.constant 0 : i32
    %c0_i32_0 = arith.constant 0 : i32
    %c0_i32_1 = arith.constant 0 : i32
    return %c0_i32, %c0_i32_0 : i32, i32
  }
  func.func @transform_5(%arg0: i32) -> (i32, i32) {
    %c0_i32 = arith.constant 0 : i32
    %c0_i32_0 = arith.constant 0 : i32
    %c0_i32_1 = arith.constant 0 : i32
    return %c0_i32, %c0_i32_0 : i32, i32
  }
  func.func @transform_6(%arg0: i32) -> (i32, i32) {
    %c0_i32 = arith.constant 0 : i32
    %c0_i32_0 = arith.constant 0 : i32
    return %arg0, %c0_i32 : i32, i32
  }
  func.func @transform_7(%arg0: i32) -> (i32, i32, i32) {
    %c0_i32 = arith.constant 0 : i32
    %c0_i32_0 = arith.constant 0 : i32
    %c0_i32_1 = arith.constant 0 : i32
    return %arg0, %c0_i32, %c0_i32_0 : i32, i32, i32
  }
}

</mosaic_0001>

<llo_original>
// kernel: classifier_forward.3
$region0: #{classifier_forward.3}
  #allocation0 [shape = 'u32[]', space=smem, size = 0x4, offset = 0x4, fixed_abs, tag = 'smem constant byte address 0x4 - core index']
  #allocation1 [shape = 'u32[144,128]{1,0:T(1,128)}', space=vmem, size = 0x12000, scoped, tag = 'internal scratch']
  #allocation2 [shape = 'f32[1,1]{1,0:T(1,128)S(6)}', space=smem, size = 0x200, scoped, tag = 'scoped memory for classifier_forward.3']
  %s0 = inlined_call_operand.vmem [shape: f32[8,384], index: 0, kind: input, shape index: {}]
  %s1 = inlined_call_operand.vmem [shape: f32[1,384], index: 1, kind: input, shape index: {}]
  %s2 = inlined_call_operand.vmem [shape: f32[1,384], index: 2, kind: input, shape index: {}]
  %s3 = inlined_call_operand.vmem [shape: f32[1,384], index: 3, kind: input, shape index: {}]
  %s4 = inlined_call_operand.<no memory space> [shape: f32[1,1], index: 4, kind: input, shape index: {}]
  %s5 = inlined_call_operand.vmem [shape: f32[8,1], index: 5, kind: output, shape index: {}]
  %s6 = sld [smem:[#allocation0]]
  $region30: #{classifier_forward.3} parent=0
    _
  %s8 = ssub.s32 1, %s6
  %s9 = scalar_select 0, %s8, %s6
  %10 = sst [smem:[#allocation2]] %s4
  // Predicated region
  $region2: #{classifier_forward.3} parent=0 // pred_check
    _
  $region3: #{classifier_forward.3} parent=0 // pred_check_branch
    %12 = sbr.rel (0) target = $region5
  $region4: #{classifier_forward.3} parent=0 // pred_region
    _
  $region5: #{classifier_forward.3} parent=0 // pred_fallthru
    _
  // Predicated region
  $region6: #{classifier_forward.3} parent=0 // pred_check
    _
  $region7: #{classifier_forward.3} parent=0 // pred_check_branch
    %14 = sbr.rel (0) target = $region9
  $region8: #{classifier_forward.3} parent=0 // pred_region
    _
  $region9: #{classifier_forward.3} parent=0 // pred_fallthru
    _
  // Predicated region
  $region10: #{classifier_forward.3} parent=0 // pred_check
    _
  $region11: #{classifier_forward.3} parent=0 // pred_check_branch
    %16 = sbr.rel (0) target = $region13
  $region12: #{classifier_forward.3} parent=0 // pred_region
    _
  $region13: #{classifier_forward.3} parent=0 // pred_fallthru
    _
  // Predicated region
  $region14: #{classifier_forward.3} parent=0 // pred_check
    _
  $region15: #{classifier_forward.3} parent=0 // pred_check_branch
    %18 = sbr.rel (0) target = $region17
  $region16: #{classifier_forward.3} parent=0 // pred_region
    _
  $region17: #{classifier_forward.3} parent=0 // pred_fallthru
    _
  // Predicated region
  $region18: #{classifier_forward.3} parent=0 // pred_check
    _
  $region19: #{classifier_forward.3} parent=0 // pred_check_branch
    %20 = sbr.rel (0) target = $region21
  $region20: #{classifier_forward.3} parent=0 // pred_region
    _
  $region21: #{classifier_forward.3} parent=0 // pred_fallthru
    _
  %v21 = vld [vmem:[%s0] sm:$0xff]
  %v22 = vld [vmem:[%s0 + $0x8] sm:$0xff]
  %v23 = vld [vmem:[%s0 + $0x10] sm:$0xff]
  %v24 = vld [vmem:[%s1] sm:$0x7]
  %v26 = vlaneseq
  %v27 = vshrl.u32 %v26, 7
  %v28 = vsub.s32 0, %v27
  %v29 = vrot.slane %v24, %v28
  %v30 = vlaneseq
  %v31 = vshrl.u32 %v30, 7
  %v32 = vsub.s32 1, %v31
  %v33 = vrot.slane %v24, %v32
  %v34 = vlaneseq
  %v35 = vshrl.u32 %v34, 7
  %v36 = vsub.s32 2, %v35
  %v37 = vrot.slane %v24, %v36
  %v41 = vmul.f32 %v21, %v29
  %v42 = vmul.f32 %v22, %v33
  %v43 = vmul.f32 %v23, %v37
  %v44 = vld [vmem:[%s2] sm:$0x7]
  %v46 = vlaneseq
  %v47 = vshrl.u32 %v46, 7
  %v48 = vsub.s32 0, %v47
  %v49 = vrot.slane %v44, %v48
  %v50 = vlaneseq
  %v51 = vshrl.u32 %v50, 7
  %v52 = vsub.s32 1, %v51
  %v53 = vrot.slane %v44, %v52
  %v54 = vlaneseq
  %v55 = vshrl.u32 %v54, 7
  %v56 = vsub.s32 2, %v55
  %v57 = vrot.slane %v44, %v56
  %v61 = vadd.f32 %v41, %v49
  %v62 = vadd.f32 %v42, %v53
  %v63 = vadd.f32 %v43, %v57
  %v64 = vtanh.pop %v61
  %v65 = vtanh.pop %v62
  %v66 = vtanh.pop %v63
  %v67 = vld [vmem:[%s3] sm:$0x7]
  %v69 = vlaneseq
  %v70 = vshrl.u32 %v69, 7
  %v71 = vsub.s32 0, %v70
  %v72 = vrot.slane %v67, %v71
  %v73 = vlaneseq
  %v74 = vshrl.u32 %v73, 7
  %v75 = vsub.s32 1, %v74
  %v76 = vrot.slane %v67, %v75
  %v77 = vlaneseq
  %v78 = vshrl.u32 %v77, 7
  %v79 = vsub.s32 2, %v78
  %v80 = vrot.slane %v67, %v79
  %v84 = vmul.f32 %v64, %v72
  %v85 = vmul.f32 %v65, %v76
  %v86 = vmul.f32 %v66, %v80
  %v87 = vadd.f32 %v84, %v85
  %v88 = vadd.f32 %v87, %v86
  %89 = vadd.xlane.f32.xlu0 %v88
  %v90 = vpop.xlane.xlu0 %89
  %s91 = sld [smem:[#allocation2]]
  %v92 = vstv %s91
  %v93 = vadd.f32 %v90, %v92
  %v94 = vxor.u32 %v93, 2147483648
  %v95 = vmul.f32 %v94, 1.442695
  %v96 = vpow.pop %v95
  %v97 = vadd.f32 %v96, 1.0
  %v98 = vrcp.pop %v97
  %v99 = vmul.f32 1.0, %v98
  %vm100 = vcmask 7168
  %101 = vst.msk [vmem:[%s5] sm:$0xff] %vm100, %v99
  // Predicated region
  $region22: #{classifier_forward.3} parent=0 // pred_check
    _
  $region23: #{classifier_forward.3} parent=0 // pred_check_branch
    %103 = sbr.rel (0) target = $region25
  $region24: #{classifier_forward.3} parent=0 // pred_region
    _
  $region25: #{classifier_forward.3} parent=0 // pred_fallthru
    _
  // Predicated region
  $region26: #{classifier_forward.3} parent=0 // pred_check
    _
  $region27: #{classifier_forward.3} parent=0 // pred_check_branch
    %105 = sbr.rel (0) target = $region29
  $region28: #{classifier_forward.3} parent=0 // pred_region
    _
  $region29: #{classifier_forward.3} parent=0 // pred_fallthru
    _

// kernel: classifier_forward.2
$region0: #{classifier_forward.2}
  #allocation0 [shape = 'u32[]', space=smem, size = 0x4, offset = 0x4, fixed_abs, tag = 'smem constant byte address 0x4 - core index']
  #allocation1 [shape = 'u32[144,128]{1,0:T(1,128)}', space=vmem, size = 0x12000, scoped, tag = 'internal scratch']
  %s0 = inlined_call_operand.vmem [shape: bf16[8,384], index: 0, kind: input, shape index: {}]
  %s1 = inlined_call_operand.vmem [shape: bf16[384,768], index: 1, kind: input, shape index: {}]
  %s2 = inlined_call_operand.vmem [shape: f32[1,768], index: 2, kind: input, shape index: {}]
  %s3 = inlined_call_operand.vmem [shape: bf16[768,512], index: 3, kind: input, shape index: {}]
  %s4 = inlined_call_operand.vmem [shape: f32[1,512], index: 4, kind: input, shape index: {}]
  %s5 = inlined_call_operand.vmem [shape: bf16[512,384], index: 5, kind: input, shape index: {}]
  %s6 = inlined_call_operand.vmem [shape: f32[8,384], index: 6, kind: output, shape index: {0}]
  %s7 = inlined_call_operand.vmem [shape: f32[1,2,384], index: 7, kind: output, shape index: {1}]
  %8 = xla_tuple %s6, %s7
  %s9 = sld [smem:[#allocation0]]
  $region42: #{classifier_forward.2} parent=0
    _
  %s11 = ssub.s32 1, %s9
  %s12 = scalar_select 0, %s11, %s9
  // Predicated region
  $region2: #{classifier_forward.2} parent=0 // pred_check
    _
  $region3: #{classifier_forward.2} parent=0 // pred_check_branch
    %14 = sbr.rel (0) target = $region5
  $region4: #{classifier_forward.2} parent=0 // pred_region
    _
  $region5: #{classifier_forward.2} parent=0 // pred_fallthru
    _
  // Predicated region
  $region6: #{classifier_forward.2} parent=0 // pred_check
    _
  $region7: #{classifier_forward.2} parent=0 // pred_check_branch
    %16 = sbr.rel (0) target = $region9
  $region8: #{classifier_forward.2} parent=0 // pred_region
    _
  $region9: #{classifier_forward.2} parent=0 // pred_fallthru
    _
  // Predicated region
  $region10: #{classifier_forward.2} parent=0 // pred_check
    _
  $region11: #{classifier_forward.2} parent=0 // pred_check_branch
    %18 = sbr.rel (0) target = $region13
  $region12: #{classifier_forward.2} parent=0 // pred_region
    _
  $region13: #{classifier_forward.2} parent=0 // pred_fallthru
    _
  // Predicated region
  $region14: #{classifier_forward.2} parent=0 // pred_check
    _
  $region15: #{classifier_forward.2} parent=0 // pred_check_branch
    %20 = sbr.rel (0) target = $region17
  $region16: #{classifier_forward.2} parent=0 // pred_region
    _
  $region17: #{classifier_forward.2} parent=0 // pred_fallthru
    _
  // Predicated region
  $region18: #{classifier_forward.2} parent=0 // pred_check
    _
  $region19: #{classifier_forward.2} parent=0 // pred_check_branch
    %22 = sbr.rel (0) target = $region21
  $region20: #{classifier_forward.2} parent=0 // pred_region
    _
  $region21: #{classifier_forward.2} parent=0 // pred_fallthru
    _
  // Predicated region
  $region22: #{classifier_forward.2} parent=0 // pred_check
    _
  $region23: #{classifier_forward.2} parent=0 // pred_check_branch
    %24 = sbr.rel (0) target = $region25
  $region24: #{classifier_forward.2} parent=0 // pred_region
    _
  $region25: #{classifier_forward.2} parent=0 // pred_fallthru
    _
  %v26 = vld [vmem:[%s0] sm:$0xff]
  %v27 = vld [vmem:[%s0 + $0x8] sm:$0xf]
  %v28 = vld [vmem:[%s1] sm:$0xff]
  %v29 = vld [vmem:[%s1 + $0x8] sm:$0xff]
  %v30 = vld [vmem:[%s1 + $0x10] sm:$0xff]
  %v31 = vld [vmem:[%s1 + $0x18] sm:$0xff]
  %v32 = vld [vmem:[%s1 + $0x20] sm:$0xff]
  %v33 = vld [vmem:[%s1 + $0x28] sm:$0xff]
  %v34 = vld [vmem:[%s1 + $0x30] sm:$0xff]
  %v35 = vld [vmem:[%s1 + $0x38] sm:$0xff]
  %v36 = vld [vmem:[%s1 + $0x40] sm:$0xff]
  %v37 = vld [vmem:[%s1 + $0x48] sm:$0xff]
  %v38 = vld [vmem:[%s1 + $0x50] sm:$0xff]
  %v39 = vld [vmem:[%s1 + $0x58] sm:$0xff]
  %v40 = vld [vmem:[%s1 + $0x60] sm:$0xff]
  %v41 = vld [vmem:[%s1 + $0x68] sm:$0xff]
  %v42 = vld [vmem:[%s1 + $0x70] sm:$0xff]
  %v43 = vld [vmem:[%s1 + $0x78] sm:$0xff]
  %v44 = vld [vmem:[%s1 + $0x80] sm:$0xff]
  %v45 = vld [vmem:[%s1 + $0x88] sm:$0xff]
  %v46 = vld [vmem:[%s1 + $0x90] sm:$0xff]
  %v47 = vld [vmem:[%s1 + $0x98] sm:$0xff]
  %v48 = vld [vmem:[%s1 + $0xa0] sm:$0xff]
  %v49 = vld [vmem:[%s1 + $0xa8] sm:$0xff]
  %v50 = vld [vmem:[%s1 + $0xb0] sm:$0xff]
  %v51 = vld [vmem:[%s1 + $0xb8] sm:$0xff]
  %v52 = vld [vmem:[%s1 + $0xc0] sm:$0xff]
  %v53 = vld [vmem:[%s1 + $0xc8] sm:$0xff]
  %v54 = vld [vmem:[%s1 + $0xd0] sm:$0xff]
  %v55 = vld [vmem:[%s1 + $0xd8] sm:$0xff]
  %v56 = vld [vmem:[%s1 + $0xe0] sm:$0xff]
  %v57 = vld [vmem:[%s1 + $0xe8] sm:$0xff]
  %v58 = vld [vmem:[%s1 + $0xf0] sm:$0xff]
  %v59 = vld [vmem:[%s1 + $0xf8] sm:$0xff]
  %v60 = vld [vmem:[%s1 + $0x100] sm:$0xff]
  %v61 = vld [vmem:[%s1 + $0x108] sm:$0xff]
  %v62 = vld [vmem:[%s1 + $0x110] sm:$0xff]
  %v63 = vld [vmem:[%s1 + $0x118] sm:$0xff]
  %v64 = vld [vmem:[%s1 + $0x120] sm:$0xff]
  %v65 = vld [vmem:[%s1 + $0x128] sm:$0xff]
  %v66 = vld [vmem:[%s1 + $0x130] sm:$0xff]
  %v67 = vld [vmem:[%s1 + $0x138] sm:$0xff]
  %v68 = vld [vmem:[%s1 + $0x140] sm:$0xff]
  %v69 = vld [vmem:[%s1 + $0x148] sm:$0xff]
  %v70 = vld [vmem:[%s1 + $0x150] sm:$0xff]
  %v71 = vld [vmem:[%s1 + $0x158] sm:$0xff]
  %v72 = vld [vmem:[%s1 + $0x160] sm:$0xff]
  %v73 = vld [vmem:[%s1 + $0x168] sm:$0xff]
  %v74 = vld [vmem:[%s1 + $0x170] sm:$0xff]
  %v75 = vld [vmem:[%s1 + $0x178] sm:$0xff]
  %v76 = vld [vmem:[%s1 + $0x180] sm:$0xff]
  %v77 = vld [vmem:[%s1 + $0x188] sm:$0xff]
  %v78 = vld [vmem:[%s1 + $0x190] sm:$0xff]
  %v79 = vld [vmem:[%s1 + $0x198] sm:$0xff]
  %v80 = vld [vmem:[%s1 + $0x1a0] sm:$0xff]
  %v81 = vld [vmem:[%s1 + $0x1a8] sm:$0xff]
  %v82 = vld [vmem:[%s1 + $0x1b0] sm:$0xff]
  %v83 = vld [vmem:[%s1 + $0x1b8] sm:$0xff]
  %v84 = vld [vmem:[%s1 + $0x1c0] sm:$0xff]
  %v85 = vld [vmem:[%s1 + $0x1c8] sm:$0xff]
  %v86 = vld [vmem:[%s1 + $0x1d0] sm:$0xff]
  %v87 = vld [vmem:[%s1 + $0x1d8] sm:$0xff]
  %v88 = vld [vmem:[%s1 + $0x1e0] sm:$0xff]
  %v89 = vld [vmem:[%s1 + $0x1e8] sm:$0xff]
  %v90 = vld [vmem:[%s1 + $0x1f0] sm:$0xff]
  %v91 = vld [vmem:[%s1 + $0x1f8] sm:$0xff]
  %v92 = vld [vmem:[%s1 + $0x200] sm:$0xff]
  %v93 = vld [vmem:[%s1 + $0x208] sm:$0xff]
  %v94 = vld [vmem:[%s1 + $0x210] sm:$0xff]
  %v95 = vld [vmem:[%s1 + $0x218] sm:$0xff]
  %v96 = vld [vmem:[%s1 + $0x220] sm:$0xff]
  %v97 = vld [vmem:[%s1 + $0x228] sm:$0xff]
  %v98 = vld [vmem:[%s1 + $0x230] sm:$0xff]
  %v99 = vld [vmem:[%s1 + $0x238] sm:$0xff]
  %v100 = vld [vmem:[%s1 + $0x240] sm:$0xff]
  %v101 = vld [vmem:[%s1 + $0x248] sm:$0xff]
  %v102 = vld [vmem:[%s1 + $0x250] sm:$0xff]
  %v103 = vld [vmem:[%s1 + $0x258] sm:$0xff]
  %v104 = vld [vmem:[%s1 + $0x260] sm:$0xff]
  %v105 = vld [vmem:[%s1 + $0x268] sm:$0xff]
  %v106 = vld [vmem:[%s1 + $0x270] sm:$0xff]
  %v107 = vld [vmem:[%s1 + $0x278] sm:$0xff]
  %v108 = vld [vmem:[%s1 + $0x280] sm:$0xff]
  %v109 = vld [vmem:[%s1 + $0x288] sm:$0xff]
  %v110 = vld [vmem:[%s1 + $0x290] sm:$0xff]
  %v111 = vld [vmem:[%s1 + $0x298] sm:$0xff]
  %v112 = vld [vmem:[%s1 + $0x2a0] sm:$0xff]
  %v113 = vld [vmem:[%s1 + $0x2a8] sm:$0xff]
  %v114 = vld [vmem:[%s1 + $0x2b0] sm:$0xff]
  %v115 = vld [vmem:[%s1 + $0x2b8] sm:$0xff]
  %v116 = vld [vmem:[%s1 + $0x2c0] sm:$0xff]
  %v117 = vld [vmem:[%s1 + $0x2c8] sm:$0xff]
  %v118 = vld [vmem:[%s1 + $0x2d0] sm:$0xff]
  %v119 = vld [vmem:[%s1 + $0x2d8] sm:$0xff]
  %v120 = vld [vmem:[%s1 + $0x2e0] sm:$0xff]
  %v121 = vld [vmem:[%s1 + $0x2e8] sm:$0xff]
  %v122 = vld [vmem:[%s1 + $0x2f0] sm:$0xff]
  %v123 = vld [vmem:[%s1 + $0x2f8] sm:$0xff]
  %v124 = vld [vmem:[%s1 + $0x300] sm:$0xff]
  %v125 = vld [vmem:[%s1 + $0x308] sm:$0xff]
  %v126 = vld [vmem:[%s1 + $0x310] sm:$0xff]
  %v127 = vld [vmem:[%s1 + $0x318] sm:$0xff]
  %v128 = vld [vmem:[%s1 + $0x320] sm:$0xff]
  %v129 = vld [vmem:[%s1 + $0x328] sm:$0xff]
  %v130 = vld [vmem:[%s1 + $0x330] sm:$0xff]
  %v131 = vld [vmem:[%s1 + $0x338] sm:$0xff]
  %v132 = vld [vmem:[%s1 + $0x340] sm:$0xff]
  %v133 = vld [vmem:[%s1 + $0x348] sm:$0xff]
  %v134 = vld [vmem:[%s1 + $0x350] sm:$0xff]
  %v135 = vld [vmem:[%s1 + $0x358] sm:$0xff]
  %v136 = vld [vmem:[%s1 + $0x360] sm:$0xff]
  %v137 = vld [vmem:[%s1 + $0x368] sm:$0xff]
  %v138 = vld [vmem:[%s1 + $0x370] sm:$0xff]
  %v139 = vld [vmem:[%s1 + $0x378] sm:$0xff]
  %v140 = vld [vmem:[%s1 + $0x380] sm:$0xff]
  %v141 = vld [vmem:[%s1 + $0x388] sm:$0xff]
  %v142 = vld [vmem:[%s1 + $0x390] sm:$0xff]
  %v143 = vld [vmem:[%s1 + $0x398] sm:$0xff]
  %v144 = vld [vmem:[%s1 + $0x3a0] sm:$0xff]
  %v145 = vld [vmem:[%s1 + $0x3a8] sm:$0xff]
  %v146 = vld [vmem:[%s1 + $0x3b0] sm:$0xff]
  %v147 = vld [vmem:[%s1 + $0x3b8] sm:$0xff]
  %v148 = vld [vmem:[%s1 + $0x3c0] sm:$0xff]
  %v149 = vld [vmem:[%s1 + $0x3c8] sm:$0xff]
  %v150 = vld [vmem:[%s1 + $0x3d0] sm:$0xff]
  %v151 = vld [vmem:[%s1 + $0x3d8] sm:$0xff]
  %v152 = vld [vmem:[%s1 + $0x3e0] sm:$0xff]
  %v153 = vld [vmem:[%s1 + $0x3e8] sm:$0xff]
  %v154 = vld [vmem:[%s1 + $0x3f0] sm:$0xff]
  %v155 = vld [vmem:[%s1 + $0x3f8] sm:$0xff]
  %v156 = vld [vmem:[%s1 + $0x400] sm:$0xff]
  %v157 = vld [vmem:[%s1 + $0x408] sm:$0xff]
  %v158 = vld [vmem:[%s1 + $0x410] sm:$0xff]
  %v159 = vld [vmem:[%s1 + $0x418] sm:$0xff]
  %v160 = vld [vmem:[%s1 + $0x420] sm:$0xff]
  %v161 = vld [vmem:[%s1 + $0x428] sm:$0xff]
  %v162 = vld [vmem:[%s1 + $0x430] sm:$0xff]
  %v163 = vld [vmem:[%s1 + $0x438] sm:$0xff]
  %v164 = vld [vmem:[%s1 + $0x440] sm:$0xff]
  %v165 = vld [vmem:[%s1 + $0x448] sm:$0xff]
  %v166 = vld [vmem:[%s1 + $0x450] sm:$0xff]
  %v167 = vld [vmem:[%s1 + $0x458] sm:$0xff]
  %v168 = vld [vmem:[%s1 + $0x460] sm:$0xff]
  %v169 = vld [vmem:[%s1 + $0x468] sm:$0xff]
  %v170 = vld [vmem:[%s1 + $0x470] sm:$0xff]
  %v171 = vld [vmem:[%s1 + $0x478] sm:$0xff]
  %v172 = vld [vmem:[%s2] sm:$0x3f]
  %v174 = vlaneseq
  %v175 = vshrl.u32 %v174, 7
  %v176 = vsub.s32 0, %v175
  %v177 = vrot.slane %v172, %v176
  %v178 = vlaneseq
  %v179 = vshrl.u32 %v178, 7
  %v180 = vsub.s32 1, %v179
  %v181 = vrot.slane %v172, %v180
  %v182 = vlaneseq
  %v183 = vshrl.u32 %v182, 7
  %v184 = vsub.s32 2, %v183
  %v185 = vrot.slane %v172, %v184
  %v186 = vlaneseq
  %v187 = vshrl.u32 %v186, 7
  %v188 = vsub.s32 3, %v187
  %v189 = vrot.slane %v172, %v188
  %v190 = vlaneseq
  %v191 = vshrl.u32 %v190, 7
  %v192 = vsub.s32 4, %v191
  %v193 = vrot.slane %v172, %v192
  %v194 = vlaneseq
  %v195 = vshrl.u32 %v194, 7
  %v196 = vsub.s32 5, %v195
  %v197 = vrot.slane %v172, %v196
  %v206 = vunpack.c.l.b16 %v26
  %v207 = vunpack.c.h.b16 %v26
  %v208 = vunpack.c.l.b16 %v27
  %v209 = vpack.c.b16 %v206, %v206
  %v210 = vpack.c.b16 %v207, %v207
  %v211 = vpack.c.b16 %v208, %v208
  %v359 = vunpack.c.l.b16 %v28
  %v360 = vunpack.c.h.b16 %v28
  %v361 = vunpack.c.l.b16 %v29
  %v362 = vunpack.c.h.b16 %v29
  %v363 = vunpack.c.l.b16 %v30
  %v364 = vunpack.c.h.b16 %v30
  %v365 = vunpack.c.l.b16 %v31
  %v366 = vunpack.c.h.b16 %v31
  %v367 = vunpack.c.l.b16 %v32
  %v368 = vunpack.c.h.b16 %v32
  %v369 = vunpack.c.l.b16 %v33
  %v370 = vunpack.c.h.b16 %v33
  %v371 = vunpack.c.l.b16 %v34
  %v372 = vunpack.c.h.b16 %v34
  %v373 = vunpack.c.l.b16 %v35
  %v374 = vunpack.c.h.b16 %v35
  %v375 = vunpack.c.l.b16 %v36
  %v376 = vunpack.c.h.b16 %v36
  %v377 = vunpack.c.l.b16 %v37
  %v378 = vunpack.c.h.b16 %v37
  %v379 = vunpack.c.l.b16 %v38
  %v380 = vunpack.c.h.b16 %v38
  %v381 = vunpack.c.l.b16 %v39
  %v382 = vunpack.c.h.b16 %v39
  %v383 = vunpack.c.l.b16 %v40
  %v384 = vunpack.c.h.b16 %v40
  %v385 = vunpack.c.l.b16 %v41
  %v386 = vunpack.c.h.b16 %v41
  %v387 = vunpack.c.l.b16 %v42
  %v388 = vunpack.c.h.b16 %v42
  %v389 = vunpack.c.l.b16 %v43
  %v390 = vunpack.c.h.b16 %v43
  %v391 = vunpack.c.l.b16 %v44
  %v392 = vunpack.c.h.b16 %v44
  %v393 = vunpack.c.l.b16 %v45
  %v394 = vunpack.c.h.b16 %v45
  %v395 = vunpack.c.l.b16 %v46
  %v396 = vunpack.c.h.b16 %v46
  %v397 = vunpack.c.l.b16 %v47
  %v398 = vunpack.c.h.b16 %v47
  %v399 = vunpack.c.l.b16 %v48
  %v400 = vunpack.c.h.b16 %v48
  %v401 = vunpack.c.l.b16 %v49
  %v402 = vunpack.c.h.b16 %v49
  %v403 = vunpack.c.l.b16 %v50
  %v404 = vunpack.c.h.b16 %v50
  %v405 = vunpack.c.l.b16 %v51
  %v406 = vunpack.c.h.b16 %v51
  %v407 = vunpack.c.l.b16 %v52
  %v408 = vunpack.c.h.b16 %v52
  %v409 = vunpack.c.l.b16 %v53
  %v410 = vunpack.c.h.b16 %v53
  %v411 = vunpack.c.l.b16 %v54
  %v412 = vunpack.c.h.b16 %v54
  %v413 = vunpack.c.l.b16 %v55
  %v414 = vunpack.c.h.b16 %v55
  %v415 = vunpack.c.l.b16 %v56
  %v416 = vunpack.c.h.b16 %v56
  %v417 = vunpack.c.l.b16 %v57
  %v418 = vunpack.c.h.b16 %v57
  %v419 = vunpack.c.l.b16 %v58
  %v420 = vunpack.c.h.b16 %v58
  %v421 = vunpack.c.l.b16 %v59
  %v422 = vunpack.c.h.b16 %v59
  %v423 = vunpack.c.l.b16 %v60
  %v424 = vunpack.c.h.b16 %v60
  %v425 = vunpack.c.l.b16 %v61
  %v426 = vunpack.c.h.b16 %v61
  %v427 = vunpack.c.l.b16 %v62
  %v428 = vunpack.c.h.b16 %v62
  %v429 = vunpack.c.l.b16 %v63
  %v430 = vunpack.c.h.b16 %v63
  %v431 = vunpack.c.l.b16 %v64
  %v432 = vunpack.c.h.b16 %v64
  %v433 = vunpack.c.l.b16 %v65
  %v434 = vunpack.c.h.b16 %v65
  %v435 = vunpack.c.l.b16 %v66
  %v436 = vunpack.c.h.b16 %v66
  %v437 = vunpack.c.l.b16 %v67
  %v438 = vunpack.c.h.b16 %v67
  %v439 = vunpack.c.l.b16 %v68
  %v440 = vunpack.c.h.b16 %v68
  %v441 = vunpack.c.l.b16 %v69
  %v442 = vunpack.c.h.b16 %v69
  %v443 = vunpack.c.l.b16 %v70
  %v444 = vunpack.c.h.b16 %v70
  %v445 = vunpack.c.l.b16 %v71
  %v446 = vunpack.c.h.b16 %v71
  %v447 = vunpack.c.l.b16 %v72
  %v448 = vunpack.c.h.b16 %v72
  %v449 = vunpack.c.l.b16 %v73
  %v450 = vunpack.c.h.b16 %v73
  %v451 = vunpack.c.l.b16 %v74
  %v452 = vunpack.c.h.b16 %v74
  %v453 = vunpack.c.l.b16 %v75
  %v454 = vunpack.c.h.b16 %v75
  %v455 = vunpack.c.l.b16 %v76
  %v456 = vunpack.c.h.b16 %v76
  %v457 = vunpack.c.l.b16 %v77
  %v458 = vunpack.c.h.b16 %v77
  %v459 = vunpack.c.l.b16 %v78
  %v460 = vunpack.c.h.b16 %v78
  %v461 = vunpack.c.l.b16 %v79
  %v462 = vunpack.c.h.b16 %v79
  %v463 = vunpack.c.l.b16 %v80
  %v464 = vunpack.c.h.b16 %v80
  %v465 = vunpack.c.l.b16 %v81
  %v466 = vunpack.c.h.b16 %v81
  %v467 = vunpack.c.l.b16 %v82
  %v468 = vunpack.c.h.b16 %v82
  %v469 = vunpack.c.l.b16 %v83
  %v470 = vunpack.c.h.b16 %v83
  %v471 = vunpack.c.l.b16 %v84
  %v472 = vunpack.c.h.b16 %v84
  %v473 = vunpack.c.l.b16 %v85
  %v474 = vunpack.c.h.b16 %v85
  %v475 = vunpack.c.l.b16 %v86
  %v476 = vunpack.c.h.b16 %v86
  %v477 = vunpack.c.l.b16 %v87
  %v478 = vunpack.c.h.b16 %v87
  %v479 = vunpack.c.l.b16 %v88
  %v480 = vunpack.c.h.b16 %v88
  %v481 = vunpack.c.l.b16 %v89
  %v482 = vunpack.c.h.b16 %v89
  %v483 = vunpack.c.l.b16 %v90
  %v484 = vunpack.c.h.b16 %v90
  %v485 = vunpack.c.l.b16 %v91
  %v486 = vunpack.c.h.b16 %v91
  %v487 = vunpack.c.l.b16 %v92
  %v488 = vunpack.c.h.b16 %v92
  %v489 = vunpack.c.l.b16 %v93
  %v490 = vunpack.c.h.b16 %v93
  %v491 = vunpack.c.l.b16 %v94
  %v492 = vunpack.c.h.b16 %v94
  %v493 = vunpack.c.l.b16 %v95
  %v494 = vunpack.c.h.b16 %v95
  %v495 = vunpack.c.l.b16 %v96
  %v496 = vunpack.c.h.b16 %v96
  %v497 = vunpack.c.l.b16 %v97
  %v498 = vunpack.c.h.b16 %v97
  %v499 = vunpack.c.l.b16 %v98
  %v500 = vunpack.c.h.b16 %v98
  %v501 = vunpack.c.l.b16 %v99
  %v502 = vunpack.c.h.b16 %v99
  %v503 = vunpack.c.l.b16 %v100
  %v504 = vunpack.c.h.b16 %v100
  %v505 = vunpack.c.l.b16 %v101
  %v506 = vunpack.c.h.b16 %v101
  %v507 = vunpack.c.l.b16 %v102
  %v508 = vunpack.c.h.b16 %v102
  %v509 = vunpack.c.l.b16 %v103
  %v510 = vunpack.c.h.b16 %v103
  %v511 = vunpack.c.l.b16 %v104
  %v512 = vunpack.c.h.b16 %v104
  %v513 = vunpack.c.l.b16 %v105
  %v514 = vunpack.c.h.b16 %v105
  %v515 = vunpack.c.l.b16 %v106
  %v516 = vunpack.c.h.b16 %v106
  %v517 = vunpack.c.l.b16 %v107
  %v518 = vunpack.c.h.b16 %v107
  %v519 = vunpack.c.l.b16 %v108
  %v520 = vunpack.c.h.b16 %v108
  %v521 = vunpack.c.l.b16 %v109
  %v522 = vunpack.c.h.b16 %v109
  %v523 = vunpack.c.l.b16 %v110
  %v524 = vunpack.c.h.b16 %v110
  %v525 = vunpack.c.l.b16 %v111
  %v526 = vunpack.c.h.b16 %v111
  %v527 = vunpack.c.l.b16 %v112
  %v528 = vunpack.c.h.b16 %v112
  %v529 = vunpack.c.l.b16 %v113
  %v530 = vunpack.c.h.b16 %v113
  %v531 = vunpack.c.l.b16 %v114
  %v532 = vunpack.c.h.b16 %v114
  %v533 = vunpack.c.l.b16 %v115
  %v534 = vunpack.c.h.b16 %v115
  %v535 = vunpack.c.l.b16 %v116
  %v536 = vunpack.c.h.b16 %v116
  %v537 = vunpack.c.l.b16 %v117
  %v538 = vunpack.c.h.b16 %v117
  %v539 = vunpack.c.l.b16 %v118
  %v540 = vunpack.c.h.b16 %v118
  %v541 = vunpack.c.l.b16 %v119
  %v542 = vunpack.c.h.b16 %v119
  %v543 = vunpack.c.l.b16 %v120
  %v544 = vunpack.c.h.b16 %v120
  %v545 = vunpack.c.l.b16 %v121
  %v546 = vunpack.c.h.b16 %v121
  %v547 = vunpack.c.l.b16 %v122
  %v548 = vunpack.c.h.b16 %v122
  %v549 = vunpack.c.l.b16 %v123
  %v550 = vunpack.c.h.b16 %v123
  %v551 = vunpack.c.l.b16 %v124
  %v552 = vunpack.c.h.b16 %v124
  %v553 = vunpack.c.l.b16 %v125
  %v554 = vunpack.c.h.b16 %v125
  %v555 = vunpack.c.l.b16 %v126
  %v556 = vunpack.c.h.b16 %v126
  %v557 = vunpack.c.l.b16 %v127
  %v558 = vunpack.c.h.b16 %v127
  %v559 = vunpack.c.l.b16 %v128
  %v560 = vunpack.c.h.b16 %v128
  %v561 = vunpack.c.l.b16 %v129
  %v562 = vunpack.c.h.b16 %v129
  %v563 = vunpack.c.l.b16 %v130
  %v564 = vunpack.c.h.b16 %v130
  %v565 = vunpack.c.l.b16 %v131
  %v566 = vunpack.c.h.b16 %v131
  %v567 = vunpack.c.l.b16 %v132
  %v568 = vunpack.c.h.b16 %v132
  %v569 = vunpack.c.l.b16 %v133
  %v570 = vunpack.c.h.b16 %v133
  %v571 = vunpack.c.l.b16 %v134
  %v572 = vunpack.c.h.b16 %v134
  %v573 = vunpack.c.l.b16 %v135
  %v574 = vunpack.c.h.b16 %v135
  %v575 = vunpack.c.l.b16 %v136
  %v576 = vunpack.c.h.b16 %v136
  %v577 = vunpack.c.l.b16 %v137
  %v578 = vunpack.c.h.b16 %v137
  %v579 = vunpack.c.l.b16 %v138
  %v580 = vunpack.c.h.b16 %v138
  %v581 = vunpack.c.l.b16 %v139
  %v582 = vunpack.c.h.b16 %v139
  %v583 = vunpack.c.l.b16 %v140
  %v584 = vunpack.c.h.b16 %v140
  %v585 = vunpack.c.l.b16 %v141
  %v586 = vunpack.c.h.b16 %v141
  %v587 = vunpack.c.l.b16 %v142
  %v588 = vunpack.c.h.b16 %v142
  %v589 = vunpack.c.l.b16 %v143
  %v590 = vunpack.c.h.b16 %v143
  %v591 = vunpack.c.l.b16 %v144
  %v592 = vunpack.c.h.b16 %v144
  %v593 = vunpack.c.l.b16 %v145
  %v594 = vunpack.c.h.b16 %v145
  %v595 = vunpack.c.l.b16 %v146
  %v596 = vunpack.c.h.b16 %v146
  %v597 = vunpack.c.l.b16 %v147
  %v598 = vunpack.c.h.b16 %v147
  %v599 = vunpack.c.l.b16 %v148
  %v600 = vunpack.c.h.b16 %v148
  %v601 = vunpack.c.l.b16 %v149
  %v602 = vunpack.c.h.b16 %v149
  %v603 = vunpack.c.l.b16 %v150
  %v604 = vunpack.c.h.b16 %v150
  %v605 = vunpack.c.l.b16 %v151
  %v606 = vunpack.c.h.b16 %v151
  %v607 = vunpack.c.l.b16 %v152
  %v608 = vunpack.c.h.b16 %v152
  %v609 = vunpack.c.l.b16 %v153
  %v610 = vunpack.c.h.b16 %v153
  %v611 = vunpack.c.l.b16 %v154
  %v612 = vunpack.c.h.b16 %v154
  %v613 = vunpack.c.l.b16 %v155
  %v614 = vunpack.c.h.b16 %v155
  %v615 = vunpack.c.l.b16 %v156
  %v616 = vunpack.c.h.b16 %v156
  %v617 = vunpack.c.l.b16 %v157
  %v618 = vunpack.c.h.b16 %v157
  %v619 = vunpack.c.l.b16 %v158
  %v620 = vunpack.c.h.b16 %v158
  %v621 = vunpack.c.l.b16 %v159
  %v622 = vunpack.c.h.b16 %v159
  %v623 = vunpack.c.l.b16 %v160
  %v624 = vunpack.c.h.b16 %v160
  %v625 = vunpack.c.l.b16 %v161
  %v626 = vunpack.c.h.b16 %v161
  %v627 = vunpack.c.l.b16 %v162
  %v628 = vunpack.c.h.b16 %v162
  %v629 = vunpack.c.l.b16 %v163
  %v630 = vunpack.c.h.b16 %v163
  %v631 = vunpack.c.l.b16 %v164
  %v632 = vunpack.c.h.b16 %v164
  %v633 = vunpack.c.l.b16 %v165
  %v634 = vunpack.c.h.b16 %v165
  %v635 = vunpack.c.l.b16 %v166
  %v636 = vunpack.c.h.b16 %v166
  %v637 = vunpack.c.l.b16 %v167
  %v638 = vunpack.c.h.b16 %v167
  %v639 = vunpack.c.l.b16 %v168
  %v640 = vunpack.c.h.b16 %v168
  %v641 = vunpack.c.l.b16 %v169
  %v642 = vunpack.c.h.b16 %v169
  %v643 = vunpack.c.l.b16 %v170
  %v644 = vunpack.c.h.b16 %v170
  %v645 = vunpack.c.l.b16 %v171
  %v646 = vunpack.c.h.b16 %v171
  %v647 = vpack.c.b16 %v365, %v359
  %v648 = vpack.c.b16 %v366, %v360
  %v649 = vpack.c.b16 %v367, %v361
  %v650 = vpack.c.b16 %v368, %v362
  %v651 = vpack.c.b16 %v369, %v363
  %v652 = vpack.c.b16 %v370, %v364
  %v653 = vpack.c.b16 %v377, %v371
  %v654 = vpack.c.b16 %v378, %v372
  %v655 = vpack.c.b16 %v379, %v373
  %v656 = vpack.c.b16 %v380, %v374
  %v657 = vpack.c.b16 %v381, %v375
  %v658 = vpack.c.b16 %v382, %v376
  %v659 = vpack.c.b16 %v389, %v383
  %v660 = vpack.c.b16 %v390, %v384
  %v661 = vpack.c.b16 %v391, %v385
  %v662 = vpack.c.b16 %v392, %v386
  %v663 = vpack.c.b16 %v393, %v387
  %v664 = vpack.c.b16 %v394, %v388
  %v665 = vpack.c.b16 %v401, %v395
  %v666 = vpack.c.b16 %v402, %v396
  %v667 = vpack.c.b16 %v403, %v397
  %v668 = vpack.c.b16 %v404, %v398
  %v669 = vpack.c.b16 %v405, %v399
  %v670 = vpack.c.b16 %v406, %v400
  %v671 = vpack.c.b16 %v413, %v407
  %v672 = vpack.c.b16 %v414, %v408
  %v673 = vpack.c.b16 %v415, %v409
  %v674 = vpack.c.b16 %v416, %v410
  %v675 = vpack.c.b16 %v417, %v411
  %v676 = vpack.c.b16 %v418, %v412
  %v677 = vpack.c.b16 %v425, %v419
  %v678 = vpack.c.b16 %v426, %v420
  %v679 = vpack.c.b16 %v427, %v421
  %v680 = vpack.c.b16 %v428, %v422
  %v681 = vpack.c.b16 %v429, %v423
  %v682 = vpack.c.b16 %v430, %v424
  %v683 = vpack.c.b16 %v437, %v431
  %v684 = vpack.c.b16 %v438, %v432
  %v685 = vpack.c.b16 %v439, %v433
  %v686 = vpack.c.b16 %v440, %v434
  %v687 = vpack.c.b16 %v441, %v435
  %v688 = vpack.c.b16 %v442, %v436
  %v689 = vpack.c.b16 %v449, %v443
  %v690 = vpack.c.b16 %v450, %v444
  %v691 = vpack.c.b16 %v451, %v445
  %v692 = vpack.c.b16 %v452, %v446
  %v693 = vpack.c.b16 %v453, %v447
  %v694 = vpack.c.b16 %v454, %v448
  %v695 = vpack.c.b16 %v461, %v455
  %v696 = vpack.c.b16 %v462, %v456
  %v697 = vpack.c.b16 %v463, %v457
  %v698 = vpack.c.b16 %v464, %v458
  %v699 = vpack.c.b16 %v465, %v459
  %v700 = vpack.c.b16 %v466, %v460
  %v701 = vpack.c.b16 %v473, %v467
  %v702 = vpack.c.b16 %v474, %v468
  %v703 = vpack.c.b16 %v475, %v469
  %v704 = vpack.c.b16 %v476, %v470
  %v705 = vpack.c.b16 %v477, %v471
  %v706 = vpack.c.b16 %v478, %v472
  %v707 = vpack.c.b16 %v485, %v479
  %v708 = vpack.c.b16 %v486, %v480
  %v709 = vpack.c.b16 %v487, %v481
  %v710 = vpack.c.b16 %v488, %v482
  %v711 = vpack.c.b16 %v489, %v483
  %v712 = vpack.c.b16 %v490, %v484
  %v713 = vpack.c.b16 %v497, %v491
  %v714 = vpack.c.b16 %v498, %v492
  %v715 = vpack.c.b16 %v499, %v493
  %v716 = vpack.c.b16 %v500, %v494
  %v717 = vpack.c.b16 %v501, %v495
  %v718 = vpack.c.b16 %v502, %v496
  %v719 = vpack.c.b16 %v509, %v503
  %v720 = vpack.c.b16 %v510, %v504
  %v721 = vpack.c.b16 %v511, %v505
  %v722 = vpack.c.b16 %v512, %v506
  %v723 = vpack.c.b16 %v513, %v507
  %v724 = vpack.c.b16 %v514, %v508
  %v725 = vpack.c.b16 %v521, %v515
  %v726 = vpack.c.b16 %v522, %v516
  %v727 = vpack.c.b16 %v523, %v517
  %v728 = vpack.c.b16 %v524, %v518
  %v729 = vpack.c.b16 %v525, %v519
  %v730 = vpack.c.b16 %v526, %v520
  %v731 = vpack.c.b16 %v533, %v527
  %v732 = vpack.c.b16 %v534, %v528
  %v733 = vpack.c.b16 %v535, %v529
  %v734 = vpack.c.b16 %v536, %v530
  %v735 = vpack.c.b16 %v537, %v531
  %v736 = vpack.c.b16 %v538, %v532
  %v737 = vpack.c.b16 %v545, %v539
  %v738 = vpack.c.b16 %v546, %v540
  %v739 = vpack.c.b16 %v547, %v541
  %v740 = vpack.c.b16 %v548, %v542
  %v741 = vpack.c.b16 %v549, %v543
  %v742 = vpack.c.b16 %v550, %v544
  %v743 = vpack.c.b16 %v557, %v551
  %v744 = vpack.c.b16 %v558, %v552
  %v745 = vpack.c.b16 %v559, %v553
  %v746 = vpack.c.b16 %v560, %v554
  %v747 = vpack.c.b16 %v561, %v555
  %v748 = vpack.c.b16 %v562, %v556
  %v749 = vpack.c.b16 %v569, %v563
  %v750 = vpack.c.b16 %v570, %v564
  %v751 = vpack.c.b16 %v571, %v565
  %v752 = vpack.c.b16 %v572, %v566
  %v753 = vpack.c.b16 %v573, %v567
  %v754 = vpack.c.b16 %v574, %v568
  %v755 = vpack.c.b16 %v581, %v575
  %v756 = vpack.c.b16 %v582, %v576
  %v757 = vpack.c.b16 %v583, %v577
  %v758 = vpack.c.b16 %v584, %v578
  %v759 = vpack.c.b16 %v585, %v579
  %v760 = vpack.c.b16 %v586, %v580
  %v761 = vpack.c.b16 %v593, %v587
  %v762 = vpack.c.b16 %v594, %v588
  %v763 = vpack.c.b16 %v595, %v589
  %v764 = vpack.c.b16 %v596, %v590
  %v765 = vpack.c.b16 %v597, %v591
  %v766 = vpack.c.b16 %v598, %v592
  %v767 = vpack.c.b16 %v605, %v599
  %v768 = vpack.c.b16 %v606, %v600
  %v769 = vpack.c.b16 %v607, %v601
  %v770 = vpack.c.b16 %v608, %v602
  %v771 = vpack.c.b16 %v609, %v603
  %v772 = vpack.c.b16 %v610, %v604
  %v773 = vpack.c.b16 %v617, %v611
  %v774 = vpack.c.b16 %v618, %v612
  %v775 = vpack.c.b16 %v619, %v613
  %v776 = vpack.c.b16 %v620, %v614
  %v777 = vpack.c.b16 %v621, %v615
  %v778 = vpack.c.b16 %v622, %v616
  %v779 = vpack.c.b16 %v629, %v623
  %v780 = vpack.c.b16 %v630, %v624
  %v781 = vpack.c.b16 %v631, %v625
  %v782 = vpack.c.b16 %v632, %v626
  %v783 = vpack.c.b16 %v633, %v627
  %v784 = vpack.c.b16 %v634, %v628
  %v785 = vpack.c.b16 %v641, %v635
  %v786 = vpack.c.b16 %v642, %v636
  %v787 = vpack.c.b16 %v643, %v637
  %v788 = vpack.c.b16 %v644, %v638
  %v789 = vpack.c.b16 %v645, %v639
  %v790 = vpack.c.b16 %v646, %v640
  %935 = vmatprep.subr.bf16.mxu0 %v690
  %936 = vmatpush1.bf16.msra.mxu0 %v689
  %937 = vmatprep.subr.bf16.mxu0 %v684
  %938 = vmatpush1.bf16.msra.mxu0 %v683
  %939 = vmatprep.subr.bf16.mxu0 %v678
  %940 = vmatpush1.bf16.msra.mxu0 %v677
  %941 = vmatprep.subr.bf16.mxu0 %v672
  %942 = vmatpush1.bf16.msra.mxu0 %v671
  %943 = vmatprep.subr.bf16.mxu0 %v666
  %944 = vmatpush1.bf16.msra.mxu0 %v665
  %945 = vmatprep.subr.bf16.mxu0 %v660
  %946 = vmatpush1.bf16.msra.mxu0 %v659
  %947 = vmatprep.subr.bf16.mxu0 %v654
  %948 = vmatpush1.bf16.msra.mxu0 %v653
  %949 = vmatprep.subr.bf16.mxu0 %v648
  %950 = vmatpush1.bf16.msra.mxu0 %v647
  %951 = vmatprep.subr.bf16.mxu0 %v738
  %952 = vmatpush2.bf16.msra.mxu0 %v737
  %953 = vmatprep.subr.bf16.mxu0 %v732
  %954 = vmatpush2.bf16.msra.mxu0 %v731
  %955 = vmatprep.subr.bf16.mxu0 %v726
  %956 = vmatpush2.bf16.msra.mxu0 %v725
  %957 = vmatprep.subr.bf16.mxu0 %v720
  %958 = vmatpush2.bf16.msra.mxu0 %v719
  %959 = vmatprep.subr.bf16.mxu0 %v714
  %960 = vmatpush2.bf16.msra.mxu0 %v713
  %961 = vmatprep.subr.bf16.mxu0 %v708
  %962 = vmatpush2.bf16.msra.mxu0 %v707
  %963 = vmatprep.subr.bf16.mxu0 %v702
  %964 = vmatpush2.bf16.msra.mxu0 %v701
  %965 = vmatprep.subr.bf16.mxu0 %v696
  %966 = vmatpush2.bf16.msra.mxu0 %v695
  %967 = vmatprep.mubr.bf16.mxu0 %v210
  %968 = vmatmul.mubr.bf16.gmra.mxu0 %v209
  %v969 = vpop.f32.mrf.mxu0
  %v970 = vadd.f32 %v177, %v969
  %v971 = vpop.f32.mrf.mxu0
  %v972 = vadd.f32 %v181, %v971
  %v973 = vpop.f32.mrf.mxu0
  %v974 = vpop.f32.mrf.mxu0
  %975 = vdwg.mxu0
  %976 = vmatprep.subr.bf16.mxu0 %v786
  %977 = vmatpush1.bf16.msra.mxu0 %v785
  %978 = vmatprep.subr.bf16.mxu0 %v780
  %979 = vmatpush1.bf16.msra.mxu0 %v779
  %980 = vmatprep.subr.bf16.mxu0 %v774
  %981 = vmatpush1.bf16.msra.mxu0 %v773
  %982 = vmatprep.subr.bf16.mxu0 %v768
  %983 = vmatpush1.bf16.msra.mxu0 %v767
  %984 = vmatprep.subr.bf16.mxu0 %v762
  %985 = vmatpush1.bf16.msra.mxu0 %v761
  %986 = vmatprep.subr.bf16.mxu0 %v756
  %987 = vmatpush1.bf16.msra.mxu0 %v755
  %988 = vmatprep.subr.bf16.mxu0 %v750
  %989 = vmatpush1.bf16.msra.mxu0 %v749
  %990 = vmatprep.subr.bf16.mxu0 %v744
  %991 = vmatpush1.bf16.msra.mxu0 %v743
  %992 = vmatprep.subr.bf16.mxu0 0
  %993 = vmatpush2.bf16.msra.mxu0 0
  %994 = vmatprep.subr.bf16.mxu0 0
  %995 = vmatpush2.bf16.msra.mxu0 0
  %996 = vmatprep.subr.bf16.mxu0 0
  %997 = vmatpush2.bf16.msra.mxu0 0
  %998 = vmatprep.subr.bf16.mxu0 0
  %999 = vmatpush2.bf16.msra.mxu0 0
  %1000 = vmatprep.subr.bf16.mxu0 0
  %1001 = vmatpush2.bf16.msra.mxu0 0
  %1002 = vmatprep.subr.bf16.mxu0 0
  %1003 = vmatpush2.bf16.msra.mxu0 0
  %1004 = vmatprep.subr.bf16.mxu0 0
  %1005 = vmatpush2.bf16.msra.mxu0 0
  %1006 = vmatprep.subr.bf16.mxu0 0
  %1007 = vmatpush2.bf16.msra.mxu0 0
  %1008 = vmatprep.mubr.bf16.mxu0 0
  %1009 = vmatmul.mubr.bf16.gmra.mxu0 %v211
  %v1010 = vpop.f32.mrf.mxu0
  %v1011 = vadd.f32 %v970, %v1010
  %v1012 = vpop.f32.mrf.mxu0
  %v1013 = vadd.f32 %v972, %v1012
  %v1014 = vpop.f32.mrf.mxu0
  %v1015 = vpop.f32.mrf.mxu0
  %1016 = vdwg.mxu0
  %1017 = vmatprep.subr.bf16.mxu0 %v692
  %1018 = vmatpush1.bf16.msra.mxu0 %v691
  %1019 = vmatprep.subr.bf16.mxu0 %v686
  %1020 = vmatpush1.bf16.msra.mxu0 %v685
  %1021 = vmatprep.subr.bf16.mxu0 %v680
  %1022 = vmatpush1.bf16.msra.mxu0 %v679
  %1023 = vmatprep.subr.bf16.mxu0 %v674
  %1024 = vmatpush1.bf16.msra.mxu0 %v673
  %1025 = vmatprep.subr.bf16.mxu0 %v668
  %1026 = vmatpush1.bf16.msra.mxu0 %v667
  %1027 = vmatprep.subr.bf16.mxu0 %v662
  %1028 = vmatpush1.bf16.msra.mxu0 %v661
  %1029 = vmatprep.subr.bf16.mxu0 %v656
  %1030 = vmatpush1.bf16.msra.mxu0 %v655
  %1031 = vmatprep.subr.bf16.mxu0 %v650
  %1032 = vmatpush1.bf16.msra.mxu0 %v649
  %1033 = vmatprep.subr.bf16.mxu0 %v740
  %1034 = vmatpush2.bf16.msra.mxu0 %v739
  %1035 = vmatprep.subr.bf16.mxu0 %v734
  %1036 = vmatpush2.bf16.msra.mxu0 %v733
  %1037 = vmatprep.subr.bf16.mxu0 %v728
  %1038 = vmatpush2.bf16.msra.mxu0 %v727
  %1039 = vmatprep.subr.bf16.mxu0 %v722
  %1040 = vmatpush2.bf16.msra.mxu0 %v721
  %1041 = vmatprep.subr.bf16.mxu0 %v716
  %1042 = vmatpush2.bf16.msra.mxu0 %v715
  %1043 = vmatprep.subr.bf16.mxu0 %v710
  %1044 = vmatpush2.bf16.msra.mxu0 %v709
  %1045 = vmatprep.subr.bf16.mxu0 %v704
  %1046 = vmatpush2.bf16.msra.mxu0 %v703
  %1047 = vmatprep.subr.bf16.mxu0 %v698
  %1048 = vmatpush2.bf16.msra.mxu0 %v697
  %1049 = vmatprep.mubr.bf16.mxu0 %v210
  %1050 = vmatmul.mubr.bf16.gmra.mxu0 %v209
  %v1051 = vpop.f32.mrf.mxu0
  %v1052 = vadd.f32 %v185, %v1051
  %v1053 = vpop.f32.mrf.mxu0
  %v1054 = vadd.f32 %v189, %v1053
  %v1055 = vpop.f32.mrf.mxu0
  %v1056 = vpop.f32.mrf.mxu0
  %1057 = vdwg.mxu0
  %1058 = vmatprep.subr.bf16.mxu0 %v788
  %1059 = vmatpush1.bf16.msra.mxu0 %v787
  %1060 = vmatprep.subr.bf16.mxu0 %v782
  %1061 = vmatpush1.bf16.msra.mxu0 %v781
  %1062 = vmatprep.subr.bf16.mxu0 %v776
  %1063 = vmatpush1.bf16.msra.mxu0 %v775
  %1064 = vmatprep.subr.bf16.mxu0 %v770
  %1065 = vmatpush1.bf16.msra.mxu0 %v769
  %1066 = vmatprep.subr.bf16.mxu0 %v764
  %1067 = vmatpush1.bf16.msra.mxu0 %v763
  %1068 = vmatprep.subr.bf16.mxu0 %v758
  %1069 = vmatpush1.bf16.msra.mxu0 %v757
  %1070 = vmatprep.subr.bf16.mxu0 %v752
  %1071 = vmatpush1.bf16.msra.mxu0 %v751
  %1072 = vmatprep.subr.bf16.mxu0 %v746
  %1073 = vmatpush1.bf16.msra.mxu0 %v745
  %1074 = vmatprep.subr.bf16.mxu0 0
  %1075 = vmatpush2.bf16.msra.mxu0 0
  %1076 = vmatprep.subr.bf16.mxu0 0
  %1077 = vmatpush2.bf16.msra.mxu0 0
  %1078 = vmatprep.subr.bf16.mxu0 0
  %1079 = vmatpush2.bf16.msra.mxu0 0
  %1080 = vmatprep.subr.bf16.mxu0 0
  %1081 = vmatpush2.bf16.msra.mxu0 0
  %1082 = vmatprep.subr.bf16.mxu0 0
  %1083 = vmatpush2.bf16.msra.mxu0 0
  %1084 = vmatprep.subr.bf16.mxu0 0
  %1085 = vmatpush2.bf16.msra.mxu0 0
  %1086 = vmatprep.subr.bf16.mxu0 0
  %1087 = vmatpush2.bf16.msra.mxu0 0
  %1088 = vmatprep.subr.bf16.mxu0 0
  %1089 = vmatpush2.bf16.msra.mxu0 0
  %1090 = vmatprep.mubr.bf16.mxu0 0
  %1091 = vmatmul.mubr.bf16.gmra.mxu0 %v211
  %v1092 = vpop.f32.mrf.mxu0
  %v1093 = vadd.f32 %v1052, %v1092
  %v1094 = vpop.f32.mrf.mxu0
  %v1095 = vadd.f32 %v1054, %v1094
  %v1096 = vpop.f32.mrf.mxu0
  %v1097 = vpop.f32.mrf.mxu0
  %1098 = vdwg.mxu0
  %1099 = vmatprep.subr.bf16.mxu0 %v694
  %1100 = vmatpush1.bf16.msra.mxu0 %v693
  %1101 = vmatprep.subr.bf16.mxu0 %v688
  %1102 = vmatpush1.bf16.msra.mxu0 %v687
  %1103 = vmatprep.subr.bf16.mxu0 %v682
  %1104 = vmatpush1.bf16.msra.mxu0 %v681
  %1105 = vmatprep.subr.bf16.mxu0 %v676
  %1106 = vmatpush1.bf16.msra.mxu0 %v675
  %1107 = vmatprep.subr.bf16.mxu0 %v670
  %1108 = vmatpush1.bf16.msra.mxu0 %v669
  %1109 = vmatprep.subr.bf16.mxu0 %v664
  %1110 = vmatpush1.bf16.msra.mxu0 %v663
  %1111 = vmatprep.subr.bf16.mxu0 %v658
  %1112 = vmatpush1.bf16.msra.mxu0 %v657
  %1113 = vmatprep.subr.bf16.mxu0 %v652
  %1114 = vmatpush1.bf16.msra.mxu0 %v651
  %1115 = vmatprep.subr.bf16.mxu0 %v742
  %1116 = vmatpush2.bf16.msra.mxu0 %v741
  %1117 = vmatprep.subr.bf16.mxu0 %v736
  %1118 = vmatpush2.bf16.msra.mxu0 %v735
  %1119 = vmatprep.subr.bf16.mxu0 %v730
  %1120 = vmatpush2.bf16.msra.mxu0 %v729
  %1121 = vmatprep.subr.bf16.mxu0 %v724
  %1122 = vmatpush2.bf16.msra.mxu0 %v723
  %1123 = vmatprep.subr.bf16.mxu0 %v718
  %1124 = vmatpush2.bf16.msra.mxu0 %v717
  %1125 = vmatprep.subr.bf16.mxu0 %v712
  %1126 = vmatpush2.bf16.msra.mxu0 %v711
  %1127 = vmatprep.subr.bf16.mxu0 %v706
  %1128 = vmatpush2.bf16.msra.mxu0 %v705
  %1129 = vmatprep.subr.bf16.mxu0 %v700
  %1130 = vmatpush2.bf16.msra.mxu0 %v699
  %1131 = vmatprep.mubr.bf16.mxu0 %v210
  %1132 = vmatmul.mubr.bf16.gmra.mxu0 %v209
  %v1133 = vpop.f32.mrf.mxu0
  %v1134 = vadd.f32 %v193, %v1133
  %v1135 = vpop.f32.mrf.mxu0
  %v1136 = vadd.f32 %v197, %v1135
  %v1137 = vpop.f32.mrf.mxu0
  %v1138 = vpop.f32.mrf.mxu0
  %1139 = vdwg.mxu0
  %1140 = vmatprep.subr.bf16.mxu0 %v790
  %1141 = vmatpush1.bf16.msra.mxu0 %v789
  %1142 = vmatprep.subr.bf16.mxu0 %v784
  %1143 = vmatpush1.bf16.msra.mxu0 %v783
  %1144 = vmatprep.subr.bf16.mxu0 %v778
  %1145 = vmatpush1.bf16.msra.mxu0 %v777
  %1146 = vmatprep.subr.bf16.mxu0 %v772
  %1147 = vmatpush1.bf16.msra.mxu0 %v771
  %1148 = vmatprep.subr.bf16.mxu0 %v766
  %1149 = vmatpush1.bf16.msra.mxu0 %v765
  %1150 = vmatprep.subr.bf16.mxu0 %v760
  %1151 = vmatpush1.bf16.msra.mxu0 %v759
  %1152 = vmatprep.subr.bf16.mxu0 %v754
  %1153 = vmatpush1.bf16.msra.mxu0 %v753
  %1154 = vmatprep.subr.bf16.mxu0 %v748
  %1155 = vmatpush1.bf16.msra.mxu0 %v747
  %1156 = vmatprep.subr.bf16.mxu0 0
  %1157 = vmatpush2.bf16.msra.mxu0 0
  %1158 = vmatprep.subr.bf16.mxu0 0
  %1159 = vmatpush2.bf16.msra.mxu0 0
  %1160 = vmatprep.subr.bf16.mxu0 0
  %1161 = vmatpush2.bf16.msra.mxu0 0
  %1162 = vmatprep.subr.bf16.mxu0 0
  %1163 = vmatpush2.bf16.msra.mxu0 0
  %1164 = vmatprep.subr.bf16.mxu0 0
  %1165 = vmatpush2.bf16.msra.mxu0 0
  %1166 = vmatprep.subr.bf16.mxu0 0
  %1167 = vmatpush2.bf16.msra.mxu0 0
  %1168 = vmatprep.subr.bf16.mxu0 0
  %1169 = vmatpush2.bf16.msra.mxu0 0
  %1170 = vmatprep.subr.bf16.mxu0 0
  %1171 = vmatpush2.bf16.msra.mxu0 0
  %1172 = vmatprep.mubr.bf16.mxu0 0
  %1173 = vmatmul.mubr.bf16.gmra.mxu0 %v211
  %v1174 = vpop.f32.mrf.mxu0
  %v1175 = vadd.f32 %v1134, %v1174
  %v1176 = vpop.f32.mrf.mxu0
  %v1177 = vadd.f32 %v1136, %v1176
  %v1178 = vpop.f32.mrf.mxu0
  %v1179 = vpop.f32.mrf.mxu0
  %1180 = vdwg.mxu0
  %v1181 = vtanh.pop %v1011
  %v1182 = vtanh.pop %v1013
  %v1183 = vtanh.pop %v1093
  %v1184 = vtanh.pop %v1095
  %v1185 = vtanh.pop %v1175
  %v1186 = vtanh.pop %v1177
  %v1187 = vpack.c.bf16 %v1181, %v1181
  %v1188 = vpack.c.bf16 %v1182, %v1182
  %v1189 = vpack.c.bf16 %v1183, %v1183
  %v1190 = vpack.c.bf16 %v1184, %v1184
  %v1191 = vpack.c.bf16 %v1185, %v1185
  %v1192 = vpack.c.bf16 %v1186, %v1186
  %v1193 = vld [vmem:[%s3] sm:$0xff]
  %v1194 = vld [vmem:[%s3 + $0x8] sm:$0xff]
  %v1195 = vld [vmem:[%s3 + $0x10] sm:$0xff]
  %v1196 = vld [vmem:[%s3 + $0x18] sm:$0xff]
  %v1197 = vld [vmem:[%s3 + $0x20] sm:$0xff]
  %v1198 = vld [vmem:[%s3 + $0x28] sm:$0xff]
  %v1199 = vld [vmem:[%s3 + $0x30] sm:$0xff]
  %v1200 = vld [vmem:[%s3 + $0x38] sm:$0xff]
  %v1201 = vld [vmem:[%s3 + $0x40] sm:$0xff]
  %v1202 = vld [vmem:[%s3 + $0x48] sm:$0xff]
  %v1203 = vld [vmem:[%s3 + $0x50] sm:$0xff]
  %v1204 = vld [vmem:[%s3 + $0x58] sm:$0xff]
  %v1205 = vld [vmem:[%s3 + $0x60] sm:$0xff]
  %v1206 = vld [vmem:[%s3 + $0x68] sm:$0xff]
  %v1207 = vld [vmem:[%s3 + $0x70] sm:$0xff]
  %v1208 = vld [vmem:[%s3 + $0x78] sm:$0xff]
  %v1209 = vld [vmem:[%s3 + $0x80] sm:$0xff]
  %v1210 = vld [vmem:[%s3 + $0x88] sm:$0xff]
  %v1211 = vld [vmem:[%s3 + $0x90] sm:$0xff]
  %v1212 = vld [vmem:[%s3 + $0x98] sm:$0xff]
  %v1213 = vld [vmem:[%s3 + $0xa0] sm:$0xff]
  %v1214 = vld [vmem:[%s3 + $0xa8] sm:$0xff]
  %v1215 = vld [vmem:[%s3 + $0xb0] sm:$0xff]
  %v1216 = vld [vmem:[%s3 + $0xb8] sm:$0xff]
  %v1217 = vld [vmem:[%s3 + $0xc0] sm:$0xff]
  %v1218 = vld [vmem:[%s3 + $0xc8] sm:$0xff]
  %v1219 = vld [vmem:[%s3 + $0xd0] sm:$0xff]
  %v1220 = vld [vmem:[%s3 + $0xd8] sm:$0xff]
  %v1221 = vld [vmem:[%s3 + $0xe0] sm:$0xff]
  %v1222 = vld [vmem:[%s3 + $0xe8] sm:$0xff]
  %v1223 = vld [vmem:[%s3 + $0xf0] sm:$0xff]
  %v1224 = vld [vmem:[%s3 + $0xf8] sm:$0xff]
  %v1225 = vld [vmem:[%s3 + $0x100] sm:$0xff]
  %v1226 = vld [vmem:[%s3 + $0x108] sm:$0xff]
  %v1227 = vld [vmem:[%s3 + $0x110] sm:$0xff]
  %v1228 = vld [vmem:[%s3 + $0x118] sm:$0xff]
  %v1229 = vld [vmem:[%s3 + $0x120] sm:$0xff]
  %v1230 = vld [vmem:[%s3 + $0x128] sm:$0xff]
  %v1231 = vld [vmem:[%s3 + $0x130] sm:$0xff]
  %v1232 = vld [vmem:[%s3 + $0x138] sm:$0xff]
  %v1233 = vld [vmem:[%s3 + $0x140] sm:$0xff]
  %v1234 = vld [vmem:[%s3 + $0x148] sm:$0xff]
  %v1235 = vld [vmem:[%s3 + $0x150] sm:$0xff]
  %v1236 = vld [vmem:[%s3 + $0x158] sm:$0xff]
  %v1237 = vld [vmem:[%s3 + $0x160] sm:$0xff]
  %v1238 = vld [vmem:[%s3 + $0x168] sm:$0xff]
  %v1239 = vld [vmem:[%s3 + $0x170] sm:$0xff]
  %v1240 = vld [vmem:[%s3 + $0x178] sm:$0xff]
  %v1241 = vld [vmem:[%s3 + $0x180] sm:$0xff]
  %v1242 = vld [vmem:[%s3 + $0x188] sm:$0xff]
  %v1243 = vld [vmem:[%s3 + $0x190] sm:$0xff]
  %v1244 = vld [vmem:[%s3 + $0x198] sm:$0xff]
  %v1245 = vld [vmem:[%s3 + $0x1a0] sm:$0xff]
  %v1246 = vld [vmem:[%s3 + $0x1a8] sm:$0xff]
  %v1247 = vld [vmem:[%s3 + $0x1b0] sm:$0xff]
  %v1248 = vld [vmem:[%s3 + $0x1b8] sm:$0xff]
  %v1249 = vld [vmem:[%s3 + $0x1c0] sm:$0xff]
  %v1250 = vld [vmem:[%s3 + $0x1c8] sm:$0xff]
  %v1251 = vld [vmem:[%s3 + $0x1d0] sm:$0xff]
  %v1252 = vld [vmem:[%s3 + $0x1d8] sm:$0xff]
  %v1253 = vld [vmem:[%s3 + $0x1e0] sm:$0xff]
  %v1254 = vld [vmem:[%s3 + $0x1e8] sm:$0xff]
  %v1255 = vld [vmem:[%s3 + $0x1f0] sm:$0xff]
  %v1256 = vld [vmem:[%s3 + $0x1f8] sm:$0xff]
  %v1257 = vld [vmem:[%s3 + $0x200] sm:$0xff]
  %v1258 = vld [vmem:[%s3 + $0x208] sm:$0xff]
  %v1259 = vld [vmem:[%s3 + $0x210] sm:$0xff]
  %v1260 = vld [vmem:[%s3 + $0x218] sm:$0xff]
  %v1261 = vld [vmem:[%s3 + $0x220] sm:$0xff]
  %v1262 = vld [vmem:[%s3 + $0x228] sm:$0xff]
  %v1263 = vld [vmem:[%s3 + $0x230] sm:$0xff]
  %v1264 = vld [vmem:[%s3 + $0x238] sm:$0xff]
  %v1265 = vld [vmem:[%s3 + $0x240] sm:$0xff]
  %v1266 = vld [vmem:[%s3 + $0x248] sm:$0xff]
  %v1267 = vld [vmem:[%s3 + $0x250] sm:$0xff]
  %v1268 = vld [vmem:[%s3 + $0x258] sm:$0xff]
  %v1269 = vld [vmem:[%s3 + $0x260] sm:$0xff]
  %v1270 = vld [vmem:[%s3 + $0x268] sm:$0xff]
  %v1271 = vld [vmem:[%s3 + $0x270] sm:$0xff]
  %v1272 = vld [vmem:[%s3 + $0x278] sm:$0xff]
  %v1273 = vld [vmem:[%s3 + $0x280] sm:$0xff]
  %v1274 = vld [vmem:[%s3 + $0x288] sm:$0xff]
  %v1275 = vld [vmem:[%s3 + $0x290] sm:$0xff]
  %v1276 = vld [vmem:[%s3 + $0x298] sm:$0xff]
  %v1277 = vld [vmem:[%s3 + $0x2a0] sm:$0xff]
  %v1278 = vld [vmem:[%s3 + $0x2a8] sm:$0xff]
  %v1279 = vld [vmem:[%s3 + $0x2b0] sm:$0xff]
  %v1280 = vld [vmem:[%s3 + $0x2b8] sm:$0xff]
  %v1281 = vld [vmem:[%s3 + $0x2c0] sm:$0xff]
  %v1282 = vld [vmem:[%s3 + $0x2c8] sm:$0xff]
  %v1283 = vld [vmem:[%s3 + $0x2d0] sm:$0xff]
  %v1284 = vld [vmem:[%s3 + $0x2d8] sm:$0xff]
  %v1285 = vld [vmem:[%s3 + $0x2e0] sm:$0xff]
  %v1286 = vld [vmem:[%s3 + $0x2e8] sm:$0xff]
  %v1287 = vld [vmem:[%s3 + $0x2f0] sm:$0xff]
  %v1288 = vld [vmem:[%s3 + $0x2f8] sm:$0xff]
  %v1289 = vld [vmem:[%s3 + $0x300] sm:$0xff]
  %v1290 = vld [vmem:[%s3 + $0x308] sm:$0xff]
  %v1291 = vld [vmem:[%s3 + $0x310] sm:$0xff]
  %v1292 = vld [vmem:[%s3 + $0x318] sm:$0xff]
  %v1293 = vld [vmem:[%s3 + $0x320] sm:$0xff]
  %v1294 = vld [vmem:[%s3 + $0x328] sm:$0xff]
  %v1295 = vld [vmem:[%s3 + $0x330] sm:$0xff]
  %v1296 = vld [vmem:[%s3 + $0x338] sm:$0xff]
  %v1297 = vld [vmem:[%s3 + $0x340] sm:$0xff]
  %v1298 = vld [vmem:[%s3 + $0x348] sm:$0xff]
  %v1299 = vld [vmem:[%s3 + $0x350] sm:$0xff]
  %v1300 = vld [vmem:[%s3 + $0x358] sm:$0xff]
  %v1301 = vld [vmem:[%s3 + $0x360] sm:$0xff]
  %v1302 = vld [vmem:[%s3 + $0x368] sm:$0xff]
  %v1303 = vld [vmem:[%s3 + $0x370] sm:$0xff]
  %v1304 = vld [vmem:[%s3 + $0x378] sm:$0xff]
  %v1305 = vld [vmem:[%s3 + $0x380] sm:$0xff]
  %v1306 = vld [vmem:[%s3 + $0x388] sm:$0xff]
  %v1307 = vld [vmem:[%s3 + $0x390] sm:$0xff]
  %v1308 = vld [vmem:[%s3 + $0x398] sm:$0xff]
  %v1309 = vld [vmem:[%s3 + $0x3a0] sm:$0xff]
  %v1310 = vld [vmem:[%s3 + $0x3a8] sm:$0xff]
  %v1311 = vld [vmem:[%s3 + $0x3b0] sm:$0xff]
  %v1312 = vld [vmem:[%s3 + $0x3b8] sm:$0xff]
  %v1313 = vld [vmem:[%s3 + $0x3c0] sm:$0xff]
  %v1314 = vld [vmem:[%s3 + $0x3c8] sm:$0xff]
  %v1315 = vld [vmem:[%s3 + $0x3d0] sm:$0xff]
  %v1316 = vld [vmem:[%s3 + $0x3d8] sm:$0xff]
  %v1317 = vld [vmem:[%s3 + $0x3e0] sm:$0xff]
  %v1318 = vld [vmem:[%s3 + $0x3e8] sm:$0xff]
  %v1319 = vld [vmem:[%s3 + $0x3f0] sm:$0xff]
  %v1320 = vld [vmem:[%s3 + $0x3f8] sm:$0xff]
  %v1321 = vld [vmem:[%s3 + $0x400] sm:$0xff]
  %v1322 = vld [vmem:[%s3 + $0x408] sm:$0xff]
  %v1323 = vld [vmem:[%s3 + $0x410] sm:$0xff]
  %v1324 = vld [vmem:[%s3 + $0x418] sm:$0xff]
  %v1325 = vld [vmem:[%s3 + $0x420] sm:$0xff]
  %v1326 = vld [vmem:[%s3 + $0x428] sm:$0xff]
  %v1327 = vld [vmem:[%s3 + $0x430] sm:$0xff]
  %v1328 = vld [vmem:[%s3 + $0x438] sm:$0xff]
  %v1329 = vld [vmem:[%s3 + $0x440] sm:$0xff]
  %v1330 = vld [vmem:[%s3 + $0x448] sm:$0xff]
  %v1331 = vld [vmem:[%s3 + $0x450] sm:$0xff]
  %v1332 = vld [vmem:[%s3 + $0x458] sm:$0xff]
  %v1333 = vld [vmem:[%s3 + $0x460] sm:$0xff]
  %v1334 = vld [vmem:[%s3 + $0x468] sm:$0xff]
  %v1335 = vld [vmem:[%s3 + $0x470] sm:$0xff]
  %v1336 = vld [vmem:[%s3 + $0x478] sm:$0xff]
  %v1337 = vld [vmem:[%s3 + $0x480] sm:$0xff]
  %v1338 = vld [vmem:[%s3 + $0x488] sm:$0xff]
  %v1339 = vld [vmem:[%s3 + $0x490] sm:$0xff]
  %v1340 = vld [vmem:[%s3 + $0x498] sm:$0xff]
  %v1341 = vld [vmem:[%s3 + $0x4a0] sm:$0xff]
  %v1342 = vld [vmem:[%s3 + $0x4a8] sm:$0xff]
  %v1343 = vld [vmem:[%s3 + $0x4b0] sm:$0xff]
  %v1344 = vld [vmem:[%s3 + $0x4b8] sm:$0xff]
  %v1345 = vld [vmem:[%s3 + $0x4c0] sm:$0xff]
  %v1346 = vld [vmem:[%s3 + $0x4c8] sm:$0xff]
  %v1347 = vld [vmem:[%s3 + $0x4d0] sm:$0xff]
  %v1348 = vld [vmem:[%s3 + $0x4d8] sm:$0xff]
  %v1349 = vld [vmem:[%s3 + $0x4e0] sm:$0xff]
  %v1350 = vld [vmem:[%s3 + $0x4e8] sm:$0xff]
  %v1351 = vld [vmem:[%s3 + $0x4f0] sm:$0xff]
  %v1352 = vld [vmem:[%s3 + $0x4f8] sm:$0xff]
  %v1353 = vld [vmem:[%s3 + $0x500] sm:$0xff]
  %v1354 = vld [vmem:[%s3 + $0x508] sm:$0xff]
  %v1355 = vld [vmem:[%s3 + $0x510] sm:$0xff]
  %v1356 = vld [vmem:[%s3 + $0x518] sm:$0xff]
  %v1357 = vld [vmem:[%s3 + $0x520] sm:$0xff]
  %v1358 = vld [vmem:[%s3 + $0x528] sm:$0xff]
  %v1359 = vld [vmem:[%s3 + $0x530] sm:$0xff]
  %v1360 = vld [vmem:[%s3 + $0x538] sm:$0xff]
  %v1361 = vld [vmem:[%s3 + $0x540] sm:$0xff]
  %v1362 = vld [vmem:[%s3 + $0x548] sm:$0xff]
  %v1363 = vld [vmem:[%s3 + $0x550] sm:$0xff]
  %v1364 = vld [vmem:[%s3 + $0x558] sm:$0xff]
  %v1365 = vld [vmem:[%s3 + $0x560] sm:$0xff]
  %v1366 = vld [vmem:[%s3 + $0x568] sm:$0xff]
  %v1367 = vld [vmem:[%s3 + $0x570] sm:$0xff]
  %v1368 = vld [vmem:[%s3 + $0x578] sm:$0xff]
  %v1369 = vld [vmem:[%s3 + $0x580] sm:$0xff]
  %v1370 = vld [vmem:[%s3 + $0x588] sm:$0xff]
  %v1371 = vld [vmem:[%s3 + $0x590] sm:$0xff]
  %v1372 = vld [vmem:[%s3 + $0x598] sm:$0xff]
  %v1373 = vld [vmem:[%s3 + $0x5a0] sm:$0xff]
  %v1374 = vld [vmem:[%s3 + $0x5a8] sm:$0xff]
  %v1375 = vld [vmem:[%s3 + $0x5b0] sm:$0xff]
  %v1376 = vld [vmem:[%s3 + $0x5b8] sm:$0xff]
  %v1377 = vld [vmem:[%s3 + $0x5c0] sm:$0xff]
  %v1378 = vld [vmem:[%s3 + $0x5c8] sm:$0xff]
  %v1379 = vld [vmem:[%s3 + $0x5d0] sm:$0xff]
  %v1380 = vld [vmem:[%s3 + $0x5d8] sm:$0xff]
  %v1381 = vld [vmem:[%s3 + $0x5e0] sm:$0xff]
  %v1382 = vld [vmem:[%s3 + $0x5e8] sm:$0xff]
  %v1383 = vld [vmem:[%s3 + $0x5f0] sm:$0xff]
  %v1384 = vld [vmem:[%s3 + $0x5f8] sm:$0xff]
  %v1385 = vld [vmem:[%s4] sm:$0xf]
  %v1387 = vlaneseq
  %v1388 = vshrl.u32 %v1387, 7
  %v1389 = vsub.s32 0, %v1388
  %v1390 = vrot.slane %v1385, %v1389
  %v1391 = vlaneseq
  %v1392 = vshrl.u32 %v1391, 7
  %v1393 = vsub.s32 1, %v1392
  %v1394 = vrot.slane %v1385, %v1393
  %v1395 = vlaneseq
  %v1396 = vshrl.u32 %v1395, 7
  %v1397 = vsub.s32 2, %v1396
  %v1398 = vrot.slane %v1385, %v1397
  %v1399 = vlaneseq
  %v1400 = vshrl.u32 %v1399, 7
  %v1401 = vsub.s32 3, %v1400
  %v1402 = vrot.slane %v1385, %v1401
  %v1599 = vunpack.c.l.b16 %v1193
  %v1600 = vunpack.c.h.b16 %v1193
  %v1601 = vunpack.c.l.b16 %v1194
  %v1602 = vunpack.c.h.b16 %v1194
  %v1603 = vunpack.c.l.b16 %v1195
  %v1604 = vunpack.c.h.b16 %v1195
  %v1605 = vunpack.c.l.b16 %v1196
  %v1606 = vunpack.c.h.b16 %v1196
  %v1607 = vunpack.c.l.b16 %v1197
  %v1608 = vunpack.c.h.b16 %v1197
  %v1609 = vunpack.c.l.b16 %v1198
  %v1610 = vunpack.c.h.b16 %v1198
  %v1611 = vunpack.c.l.b16 %v1199
  %v1612 = vunpack.c.h.b16 %v1199
  %v1613 = vunpack.c.l.b16 %v1200
  %v1614 = vunpack.c.h.b16 %v1200
  %v1615 = vunpack.c.l.b16 %v1201
  %v1616 = vunpack.c.h.b16 %v1201
  %v1617 = vunpack.c.l.b16 %v1202
  %v1618 = vunpack.c.h.b16 %v1202
  %v1619 = vunpack.c.l.b16 %v1203
  %v1620 = vunpack.c.h.b16 %v1203
  %v1621 = vunpack.c.l.b16 %v1204
  %v1622 = vunpack.c.h.b16 %v1204
  %v1623 = vunpack.c.l.b16 %v1205
  %v1624 = vunpack.c.h.b16 %v1205
  %v1625 = vunpack.c.l.b16 %v1206
  %v1626 = vunpack.c.h.b16 %v1206
  %v1627 = vunpack.c.l.b16 %v1207
  %v1628 = vunpack.c.h.b16 %v1207
  %v1629 = vunpack.c.l.b16 %v1208
  %v1630 = vunpack.c.h.b16 %v1208
  %v1631 = vunpack.c.l.b16 %v1209
  %v1632 = vunpack.c.h.b16 %v1209
  %v1633 = vunpack.c.l.b16 %v1210
  %v1634 = vunpack.c.h.b16 %v1210
  %v1635 = vunpack.c.l.b16 %v1211
  %v1636 = vunpack.c.h.b16 %v1211
  %v1637 = vunpack.c.l.b16 %v1212
  %v1638 = vunpack.c.h.b16 %v1212
  %v1639 = vunpack.c.l.b16 %v1213
  %v1640 = vunpack.c.h.b16 %v1213
  %v1641 = vunpack.c.l.b16 %v1214
  %v1642 = vunpack.c.h.b16 %v1214
  %v1643 = vunpack.c.l.b16 %v1215
  %v1644 = vunpack.c.h.b16 %v1215
  %v1645 = vunpack.c.l.b16 %v1216
  %v1646 = vunpack.c.h.b16 %v1216
  %v1647 = vunpack.c.l.b16 %v1217
  %v1648 = vunpack.c.h.b16 %v1217
  %v1649 = vunpack.c.l.b16 %v1218
  %v1650 = vunpack.c.h.b16 %v1218
  %v1651 = vunpack.c.l.b16 %v1219
  %v1652 = vunpack.c.h.b16 %v1219
  %v1653 = vunpack.c.l.b16 %v1220
  %v1654 = vunpack.c.h.b16 %v1220
  %v1655 = vunpack.c.l.b16 %v1221
  %v1656 = vunpack.c.h.b16 %v1221
  %v1657 = vunpack.c.l.b16 %v1222
  %v1658 = vunpack.c.h.b16 %v1222
  %v1659 = vunpack.c.l.b16 %v1223
  %v1660 = vunpack.c.h.b16 %v1223
  %v1661 = vunpack.c.l.b16 %v1224
  %v1662 = vunpack.c.h.b16 %v1224
  %v1663 = vunpack.c.l.b16 %v1225
  %v1664 = vunpack.c.h.b16 %v1225
  %v1665 = vunpack.c.l.b16 %v1226
  %v1666 = vunpack.c.h.b16 %v1226
  %v1667 = vunpack.c.l.b16 %v1227
  %v1668 = vunpack.c.h.b16 %v1227
  %v1669 = vunpack.c.l.b16 %v1228
  %v1670 = vunpack.c.h.b16 %v1228
  %v1671 = vunpack.c.l.b16 %v1229
  %v1672 = vunpack.c.h.b16 %v1229
  %v1673 = vunpack.c.l.b16 %v1230
  %v1674 = vunpack.c.h.b16 %v1230
  %v1675 = vunpack.c.l.b16 %v1231
  %v1676 = vunpack.c.h.b16 %v1231
  %v1677 = vunpack.c.l.b16 %v1232
  %v1678 = vunpack.c.h.b16 %v1232
  %v1679 = vunpack.c.l.b16 %v1233
  %v1680 = vunpack.c.h.b16 %v1233
  %v1681 = vunpack.c.l.b16 %v1234
  %v1682 = vunpack.c.h.b16 %v1234
  %v1683 = vunpack.c.l.b16 %v1235
  %v1684 = vunpack.c.h.b16 %v1235
  %v1685 = vunpack.c.l.b16 %v1236
  %v1686 = vunpack.c.h.b16 %v1236
  %v1687 = vunpack.c.l.b16 %v1237
  %v1688 = vunpack.c.h.b16 %v1237
  %v1689 = vunpack.c.l.b16 %v1238
  %v1690 = vunpack.c.h.b16 %v1238
  %v1691 = vunpack.c.l.b16 %v1239
  %v1692 = vunpack.c.h.b16 %v1239
  %v1693 = vunpack.c.l.b16 %v1240
  %v1694 = vunpack.c.h.b16 %v1240
  %v1695 = vunpack.c.l.b16 %v1241
  %v1696 = vunpack.c.h.b16 %v1241
  %v1697 = vunpack.c.l.b16 %v1242
  %v1698 = vunpack.c.h.b16 %v1242
  %v1699 = vunpack.c.l.b16 %v1243
  %v1700 = vunpack.c.h.b16 %v1243
  %v1701 = vunpack.c.l.b16 %v1244
  %v1702 = vunpack.c.h.b16 %v1244
  %v1703 = vunpack.c.l.b16 %v1245
  %v1704 = vunpack.c.h.b16 %v1245
  %v1705 = vunpack.c.l.b16 %v1246
  %v1706 = vunpack.c.h.b16 %v1246
  %v1707 = vunpack.c.l.b16 %v1247
  %v1708 = vunpack.c.h.b16 %v1247
  %v1709 = vunpack.c.l.b16 %v1248
  %v1710 = vunpack.c.h.b16 %v1248
  %v1711 = vunpack.c.l.b16 %v1249
  %v1712 = vunpack.c.h.b16 %v1249
  %v1713 = vunpack.c.l.b16 %v1250
  %v1714 = vunpack.c.h.b16 %v1250
  %v1715 = vunpack.c.l.b16 %v1251
  %v1716 = vunpack.c.h.b16 %v1251
  %v1717 = vunpack.c.l.b16 %v1252
  %v1718 = vunpack.c.h.b16 %v1252
  %v1719 = vunpack.c.l.b16 %v1253
  %v1720 = vunpack.c.h.b16 %v1253
  %v1721 = vunpack.c.l.b16 %v1254
  %v1722 = vunpack.c.h.b16 %v1254
  %v1723 = vunpack.c.l.b16 %v1255
  %v1724 = vunpack.c.h.b16 %v1255
  %v1725 = vunpack.c.l.b16 %v1256
  %v1726 = vunpack.c.h.b16 %v1256
  %v1727 = vunpack.c.l.b16 %v1257
  %v1728 = vunpack.c.h.b16 %v1257
  %v1729 = vunpack.c.l.b16 %v1258
  %v1730 = vunpack.c.h.b16 %v1258
  %v1731 = vunpack.c.l.b16 %v1259
  %v1732 = vunpack.c.h.b16 %v1259
  %v1733 = vunpack.c.l.b16 %v1260
  %v1734 = vunpack.c.h.b16 %v1260
  %v1735 = vunpack.c.l.b16 %v1261
  %v1736 = vunpack.c.h.b16 %v1261
  %v1737 = vunpack.c.l.b16 %v1262
  %v1738 = vunpack.c.h.b16 %v1262
  %v1739 = vunpack.c.l.b16 %v1263
  %v1740 = vunpack.c.h.b16 %v1263
  %v1741 = vunpack.c.l.b16 %v1264
  %v1742 = vunpack.c.h.b16 %v1264
  %v1743 = vunpack.c.l.b16 %v1265
  %v1744 = vunpack.c.h.b16 %v1265
  %v1745 = vunpack.c.l.b16 %v1266
  %v1746 = vunpack.c.h.b16 %v1266
  %v1747 = vunpack.c.l.b16 %v1267
  %v1748 = vunpack.c.h.b16 %v1267
  %v1749 = vunpack.c.l.b16 %v1268
  %v1750 = vunpack.c.h.b16 %v1268
  %v1751 = vunpack.c.l.b16 %v1269
  %v1752 = vunpack.c.h.b16 %v1269
  %v1753 = vunpack.c.l.b16 %v1270
  %v1754 = vunpack.c.h.b16 %v1270
  %v1755 = vunpack.c.l.b16 %v1271
  %v1756 = vunpack.c.h.b16 %v1271
  %v1757 = vunpack.c.l.b16 %v1272
  %v1758 = vunpack.c.h.b16 %v1272
  %v1759 = vunpack.c.l.b16 %v1273
  %v1760 = vunpack.c.h.b16 %v1273
  %v1761 = vunpack.c.l.b16 %v1274
  %v1762 = vunpack.c.h.b16 %v1274
  %v1763 = vunpack.c.l.b16 %v1275
  %v1764 = vunpack.c.h.b16 %v1275
  %v1765 = vunpack.c.l.b16 %v1276
  %v1766 = vunpack.c.h.b16 %v1276
  %v1767 = vunpack.c.l.b16 %v1277
  %v1768 = vunpack.c.h.b16 %v1277
  %v1769 = vunpack.c.l.b16 %v1278
  %v1770 = vunpack.c.h.b16 %v1278
  %v1771 = vunpack.c.l.b16 %v1279
  %v1772 = vunpack.c.h.b16 %v1279
  %v1773 = vunpack.c.l.b16 %v1280
  %v1774 = vunpack.c.h.b16 %v1280
  %v1775 = vunpack.c.l.b16 %v1281
  %v1776 = vunpack.c.h.b16 %v1281
  %v1777 = vunpack.c.l.b16 %v1282
  %v1778 = vunpack.c.h.b16 %v1282
  %v1779 = vunpack.c.l.b16 %v1283
  %v1780 = vunpack.c.h.b16 %v1283
  %v1781 = vunpack.c.l.b16 %v1284
  %v1782 = vunpack.c.h.b16 %v1284
  %v1783 = vunpack.c.l.b16 %v1285
  %v1784 = vunpack.c.h.b16 %v1285
  %v1785 = vunpack.c.l.b16 %v1286
  %v1786 = vunpack.c.h.b16 %v1286
  %v1787 = vunpack.c.l.b16 %v1287
  %v1788 = vunpack.c.h.b16 %v1287
  %v1789 = vunpack.c.l.b16 %v1288
  %v1790 = vunpack.c.h.b16 %v1288
  %v1791 = vunpack.c.l.b16 %v1289
  %v1792 = vunpack.c.h.b16 %v1289
  %v1793 = vunpack.c.l.b16 %v1290
  %v1794 = vunpack.c.h.b16 %v1290
  %v1795 = vunpack.c.l.b16 %v1291
  %v1796 = vunpack.c.h.b16 %v1291
  %v1797 = vunpack.c.l.b16 %v1292
  %v1798 = vunpack.c.h.b16 %v1292
  %v1799 = vunpack.c.l.b16 %v1293
  %v1800 = vunpack.c.h.b16 %v1293
  %v1801 = vunpack.c.l.b16 %v1294
  %v1802 = vunpack.c.h.b16 %v1294
  %v1803 = vunpack.c.l.b16 %v1295
  %v1804 = vunpack.c.h.b16 %v1295
  %v1805 = vunpack.c.l.b16 %v1296
  %v1806 = vunpack.c.h.b16 %v1296
  %v1807 = vunpack.c.l.b16 %v1297
  %v1808 = vunpack.c.h.b16 %v1297
  %v1809 = vunpack.c.l.b16 %v1298
  %v1810 = vunpack.c.h.b16 %v1298
  %v1811 = vunpack.c.l.b16 %v1299
  %v1812 = vunpack.c.h.b16 %v1299
  %v1813 = vunpack.c.l.b16 %v1300
  %v1814 = vunpack.c.h.b16 %v1300
  %v1815 = vunpack.c.l.b16 %v1301
  %v1816 = vunpack.c.h.b16 %v1301
  %v1817 = vunpack.c.l.b16 %v1302
  %v1818 = vunpack.c.h.b16 %v1302
  %v1819 = vunpack.c.l.b16 %v1303
  %v1820 = vunpack.c.h.b16 %v1303
  %v1821 = vunpack.c.l.b16 %v1304
  %v1822 = vunpack.c.h.b16 %v1304
  %v1823 = vunpack.c.l.b16 %v1305
  %v1824 = vunpack.c.h.b16 %v1305
  %v1825 = vunpack.c.l.b16 %v1306
  %v1826 = vunpack.c.h.b16 %v1306
  %v1827 = vunpack.c.l.b16 %v1307
  %v1828 = vunpack.c.h.b16 %v1307
  %v1829 = vunpack.c.l.b16 %v1308
  %v1830 = vunpack.c.h.b16 %v1308
  %v1831 = vunpack.c.l.b16 %v1309
  %v1832 = vunpack.c.h.b16 %v1309
  %v1833 = vunpack.c.l.b16 %v1310
  %v1834 = vunpack.c.h.b16 %v1310
  %v1835 = vunpack.c.l.b16 %v1311
  %v1836 = vunpack.c.h.b16 %v1311
  %v1837 = vunpack.c.l.b16 %v1312
  %v1838 = vunpack.c.h.b16 %v1312
  %v1839 = vunpack.c.l.b16 %v1313
  %v1840 = vunpack.c.h.b16 %v1313
  %v1841 = vunpack.c.l.b16 %v1314
  %v1842 = vunpack.c.h.b16 %v1314
  %v1843 = vunpack.c.l.b16 %v1315
  %v1844 = vunpack.c.h.b16 %v1315
  %v1845 = vunpack.c.l.b16 %v1316
  %v1846 = vunpack.c.h.b16 %v1316
  %v1847 = vunpack.c.l.b16 %v1317
  %v1848 = vunpack.c.h.b16 %v1317
  %v1849 = vunpack.c.l.b16 %v1318
  %v1850 = vunpack.c.h.b16 %v1318
  %v1851 = vunpack.c.l.b16 %v1319
  %v1852 = vunpack.c.h.b16 %v1319
  %v1853 = vunpack.c.l.b16 %v1320
  %v1854 = vunpack.c.h.b16 %v1320
  %v1855 = vunpack.c.l.b16 %v1321
  %v1856 = vunpack.c.h.b16 %v1321
  %v1857 = vunpack.c.l.b16 %v1322
  %v1858 = vunpack.c.h.b16 %v1322
  %v1859 = vunpack.c.l.b16 %v1323
  %v1860 = vunpack.c.h.b16 %v1323
  %v1861 = vunpack.c.l.b16 %v1324
  %v1862 = vunpack.c.h.b16 %v1324
  %v1863 = vunpack.c.l.b16 %v1325
  %v1864 = vunpack.c.h.b16 %v1325
  %v1865 = vunpack.c.l.b16 %v1326
  %v1866 = vunpack.c.h.b16 %v1326
  %v1867 = vunpack.c.l.b16 %v1327
  %v1868 = vunpack.c.h.b16 %v1327
  %v1869 = vunpack.c.l.b16 %v1328
  %v1870 = vunpack.c.h.b16 %v1328
  %v1871 = vunpack.c.l.b16 %v1329
  %v1872 = vunpack.c.h.b16 %v1329
  %v1873 = vunpack.c.l.b16 %v1330
  %v1874 = vunpack.c.h.b16 %v1330
  %v1875 = vunpack.c.l.b16 %v1331
  %v1876 = vunpack.c.h.b16 %v1331
  %v1877 = vunpack.c.l.b16 %v1332
  %v1878 = vunpack.c.h.b16 %v1332
  %v1879 = vunpack.c.l.b16 %v1333
  %v1880 = vunpack.c.h.b16 %v1333
  %v1881 = vunpack.c.l.b16 %v1334
  %v1882 = vunpack.c.h.b16 %v1334
  %v1883 = vunpack.c.l.b16 %v1335
  %v1884 = vunpack.c.h.b16 %v1335
  %v1885 = vunpack.c.l.b16 %v1336
  %v1886 = vunpack.c.h.b16 %v1336
  %v1887 = vunpack.c.l.b16 %v1337
  %v1888 = vunpack.c.h.b16 %v1337
  %v1889 = vunpack.c.l.b16 %v1338
  %v1890 = vunpack.c.h.b16 %v1338
  %v1891 = vunpack.c.l.b16 %v1339
  %v1892 = vunpack.c.h.b16 %v1339
  %v1893 = vunpack.c.l.b16 %v1340
  %v1894 = vunpack.c.h.b16 %v1340
  %v1895 = vunpack.c.l.b16 %v1341
  %v1896 = vunpack.c.h.b16 %v1341
  %v1897 = vunpack.c.l.b16 %v1342
  %v1898 = vunpack.c.h.b16 %v1342
  %v1899 = vunpack.c.l.b16 %v1343
  %v1900 = vunpack.c.h.b16 %v1343
  %v1901 = vunpack.c.l.b16 %v1344
  %v1902 = vunpack.c.h.b16 %v1344
  %v1903 = vunpack.c.l.b16 %v1345
  %v1904 = vunpack.c.h.b16 %v1345
  %v1905 = vunpack.c.l.b16 %v1346
  %v1906 = vunpack.c.h.b16 %v1346
  %v1907 = vunpack.c.l.b16 %v1347
  %v1908 = vunpack.c.h.b16 %v1347
  %v1909 = vunpack.c.l.b16 %v1348
  %v1910 = vunpack.c.h.b16 %v1348
  %v1911 = vunpack.c.l.b16 %v1349
  %v1912 = vunpack.c.h.b16 %v1349
  %v1913 = vunpack.c.l.b16 %v1350
  %v1914 = vunpack.c.h.b16 %v1350
  %v1915 = vunpack.c.l.b16 %v1351
  %v1916 = vunpack.c.h.b16 %v1351
  %v1917 = vunpack.c.l.b16 %v1352
  %v1918 = vunpack.c.h.b16 %v1352
  %v1919 = vunpack.c.l.b16 %v1353
  %v1920 = vunpack.c.h.b16 %v1353
  %v1921 = vunpack.c.l.b16 %v1354
  %v1922 = vunpack.c.h.b16 %v1354
  %v1923 = vunpack.c.l.b16 %v1355
  %v1924 = vunpack.c.h.b16 %v1355
  %v1925 = vunpack.c.l.b16 %v1356
  %v1926 = vunpack.c.h.b16 %v1356
  %v1927 = vunpack.c.l.b16 %v1357
  %v1928 = vunpack.c.h.b16 %v1357
  %v1929 = vunpack.c.l.b16 %v1358
  %v1930 = vunpack.c.h.b16 %v1358
  %v1931 = vunpack.c.l.b16 %v1359
  %v1932 = vunpack.c.h.b16 %v1359
  %v1933 = vunpack.c.l.b16 %v1360
  %v1934 = vunpack.c.h.b16 %v1360
  %v1935 = vunpack.c.l.b16 %v1361
  %v1936 = vunpack.c.h.b16 %v1361
  %v1937 = vunpack.c.l.b16 %v1362
  %v1938 = vunpack.c.h.b16 %v1362
  %v1939 = vunpack.c.l.b16 %v1363
  %v1940 = vunpack.c.h.b16 %v1363
  %v1941 = vunpack.c.l.b16 %v1364
  %v1942 = vunpack.c.h.b16 %v1364
  %v1943 = vunpack.c.l.b16 %v1365
  %v1944 = vunpack.c.h.b16 %v1365
  %v1945 = vunpack.c.l.b16 %v1366
  %v1946 = vunpack.c.h.b16 %v1366
  %v1947 = vunpack.c.l.b16 %v1367
  %v1948 = vunpack.c.h.b16 %v1367
  %v1949 = vunpack.c.l.b16 %v1368
  %v1950 = vunpack.c.h.b16 %v1368
  %v1951 = vunpack.c.l.b16 %v1369
  %v1952 = vunpack.c.h.b16 %v1369
  %v1953 = vunpack.c.l.b16 %v1370
  %v1954 = vunpack.c.h.b16 %v1370
  %v1955 = vunpack.c.l.b16 %v1371
  %v1956 = vunpack.c.h.b16 %v1371
  %v1957 = vunpack.c.l.b16 %v1372
  %v1958 = vunpack.c.h.b16 %v1372
  %v1959 = vunpack.c.l.b16 %v1373
  %v1960 = vunpack.c.h.b16 %v1373
  %v1961 = vunpack.c.l.b16 %v1374
  %v1962 = vunpack.c.h.b16 %v1374
  %v1963 = vunpack.c.l.b16 %v1375
  %v1964 = vunpack.c.h.b16 %v1375
  %v1965 = vunpack.c.l.b16 %v1376
  %v1966 = vunpack.c.h.b16 %v1376
  %v1967 = vunpack.c.l.b16 %v1377
  %v1968 = vunpack.c.h.b16 %v1377
  %v1969 = vunpack.c.l.b16 %v1378
  %v1970 = vunpack.c.h.b16 %v1378
  %v1971 = vunpack.c.l.b16 %v1379
  %v1972 = vunpack.c.h.b16 %v1379
  %v1973 = vunpack.c.l.b16 %v1380
  %v1974 = vunpack.c.h.b16 %v1380
  %v1975 = vunpack.c.l.b16 %v1381
  %v1976 = vunpack.c.h.b16 %v1381
  %v1977 = vunpack.c.l.b16 %v1382
  %v1978 = vunpack.c.h.b16 %v1382
  %v1979 = vunpack.c.l.b16 %v1383
  %v1980 = vunpack.c.h.b16 %v1383
  %v1981 = vunpack.c.l.b16 %v1384
  %v1982 = vunpack.c.h.b16 %v1384
  %v1983 = vpack.c.b16 %v1603, %v1599
  %v1984 = vpack.c.b16 %v1604, %v1600
  %v1985 = vpack.c.b16 %v1605, %v1601
  %v1986 = vpack.c.b16 %v1606, %v1602
  %v1987 = vpack.c.b16 %v1611, %v1607
  %v1988 = vpack.c.b16 %v1612, %v1608
  %v1989 = vpack.c.b16 %v1613, %v1609
  %v1990 = vpack.c.b16 %v1614, %v1610
  %v1991 = vpack.c.b16 %v1619, %v1615
  %v1992 = vpack.c.b16 %v1620, %v1616
  %v1993 = vpack.c.b16 %v1621, %v1617
  %v1994 = vpack.c.b16 %v1622, %v1618
  %v1995 = vpack.c.b16 %v1627, %v1623
  %v1996 = vpack.c.b16 %v1628, %v1624
  %v1997 = vpack.c.b16 %v1629, %v1625
  %v1998 = vpack.c.b16 %v1630, %v1626
  %v1999 = vpack.c.b16 %v1635, %v1631
  %v2000 = vpack.c.b16 %v1636, %v1632
  %v2001 = vpack.c.b16 %v1637, %v1633
  %v2002 = vpack.c.b16 %v1638, %v1634
  %v2003 = vpack.c.b16 %v1643, %v1639
  %v2004 = vpack.c.b16 %v1644, %v1640
  %v2005 = vpack.c.b16 %v1645, %v1641
  %v2006 = vpack.c.b16 %v1646, %v1642
  %v2007 = vpack.c.b16 %v1651, %v1647
  %v2008 = vpack.c.b16 %v1652, %v1648
  %v2009 = vpack.c.b16 %v1653, %v1649
  %v2010 = vpack.c.b16 %v1654, %v1650
  %v2011 = vpack.c.b16 %v1659, %v1655
  %v2012 = vpack.c.b16 %v1660, %v1656
  %v2013 = vpack.c.b16 %v1661, %v1657
  %v2014 = vpack.c.b16 %v1662, %v1658
  %v2015 = vpack.c.b16 %v1667, %v1663
  %v2016 = vpack.c.b16 %v1668, %v1664
  %v2017 = vpack.c.b16 %v1669, %v1665
  %v2018 = vpack.c.b16 %v1670, %v1666
  %v2019 = vpack.c.b16 %v1675, %v1671
  %v2020 = vpack.c.b16 %v1676, %v1672
  %v2021 = vpack.c.b16 %v1677, %v1673
  %v2022 = vpack.c.b16 %v1678, %v1674
  %v2023 = vpack.c.b16 %v1683, %v1679
  %v2024 = vpack.c.b16 %v1684, %v1680
  %v2025 = vpack.c.b16 %v1685, %v1681
  %v2026 = vpack.c.b16 %v1686, %v1682
  %v2027 = vpack.c.b16 %v1691, %v1687
  %v2028 = vpack.c.b16 %v1692, %v1688
  %v2029 = vpack.c.b16 %v1693, %v1689
  %v2030 = vpack.c.b16 %v1694, %v1690
  %v2031 = vpack.c.b16 %v1699, %v1695
  %v2032 = vpack.c.b16 %v1700, %v1696
  %v2033 = vpack.c.b16 %v1701, %v1697
  %v2034 = vpack.c.b16 %v1702, %v1698
  %v2035 = vpack.c.b16 %v1707, %v1703
  %v2036 = vpack.c.b16 %v1708, %v1704
  %v2037 = vpack.c.b16 %v1709, %v1705
  %v2038 = vpack.c.b16 %v1710, %v1706
  %v2039 = vpack.c.b16 %v1715, %v1711
  %v2040 = vpack.c.b16 %v1716, %v1712
  %v2041 = vpack.c.b16 %v1717, %v1713
  %v2042 = vpack.c.b16 %v1718, %v1714
  %v2043 = vpack.c.b16 %v1723, %v1719
  %v2044 = vpack.c.b16 %v1724, %v1720
  %v2045 = vpack.c.b16 %v1725, %v1721
  %v2046 = vpack.c.b16 %v1726, %v1722
  %v2047 = vpack.c.b16 %v1731, %v1727
  %v2048 = vpack.c.b16 %v1732, %v1728
  %v2049 = vpack.c.b16 %v1733, %v1729
  %v2050 = vpack.c.b16 %v1734, %v1730
  %v2051 = vpack.c.b16 %v1739, %v1735
  %v2052 = vpack.c.b16 %v1740, %v1736
  %v2053 = vpack.c.b16 %v1741, %v1737
  %v2054 = vpack.c.b16 %v1742, %v1738
  %v2055 = vpack.c.b16 %v1747, %v1743
  %v2056 = vpack.c.b16 %v1748, %v1744
  %v2057 = vpack.c.b16 %v1749, %v1745
  %v2058 = vpack.c.b16 %v1750, %v1746
  %v2059 = vpack.c.b16 %v1755, %v1751
  %v2060 = vpack.c.b16 %v1756, %v1752
  %v2061 = vpack.c.b16 %v1757, %v1753
  %v2062 = vpack.c.b16 %v1758, %v1754
  %v2063 = vpack.c.b16 %v1763, %v1759
  %v2064 = vpack.c.b16 %v1764, %v1760
  %v2065 = vpack.c.b16 %v1765, %v1761
  %v2066 = vpack.c.b16 %v1766, %v1762
  %v2067 = vpack.c.b16 %v1771, %v1767
  %v2068 = vpack.c.b16 %v1772, %v1768
  %v2069 = vpack.c.b16 %v1773, %v1769
  %v2070 = vpack.c.b16 %v1774, %v1770
  %v2071 = vpack.c.b16 %v1779, %v1775
  %v2072 = vpack.c.b16 %v1780, %v1776
  %v2073 = vpack.c.b16 %v1781, %v1777
  %v2074 = vpack.c.b16 %v1782, %v1778
  %v2075 = vpack.c.b16 %v1787, %v1783
  %v2076 = vpack.c.b16 %v1788, %v1784
  %v2077 = vpack.c.b16 %v1789, %v1785
  %v2078 = vpack.c.b16 %v1790, %v1786
  %v2079 = vpack.c.b16 %v1795, %v1791
  %v2080 = vpack.c.b16 %v1796, %v1792
  %v2081 = vpack.c.b16 %v1797, %v1793
  %v2082 = vpack.c.b16 %v1798, %v1794
  %v2083 = vpack.c.b16 %v1803, %v1799
  %v2084 = vpack.c.b16 %v1804, %v1800
  %v2085 = vpack.c.b16 %v1805, %v1801
  %v2086 = vpack.c.b16 %v1806, %v1802
  %v2087 = vpack.c.b16 %v1811, %v1807
  %v2088 = vpack.c.b16 %v1812, %v1808
  %v2089 = vpack.c.b16 %v1813, %v1809
  %v2090 = vpack.c.b16 %v1814, %v1810
  %v2091 = vpack.c.b16 %v1819, %v1815
  %v2092 = vpack.c.b16 %v1820, %v1816
  %v2093 = vpack.c.b16 %v1821, %v1817
  %v2094 = vpack.c.b16 %v1822, %v1818
  %v2095 = vpack.c.b16 %v1827, %v1823
  %v2096 = vpack.c.b16 %v1828, %v1824
  %v2097 = vpack.c.b16 %v1829, %v1825
  %v2098 = vpack.c.b16 %v1830, %v1826
  %v2099 = vpack.c.b16 %v1835, %v1831
  %v2100 = vpack.c.b16 %v1836, %v1832
  %v2101 = vpack.c.b16 %v1837, %v1833
  %v2102 = vpack.c.b16 %v1838, %v1834
  %v2103 = vpack.c.b16 %v1843, %v1839
  %v2104 = vpack.c.b16 %v1844, %v1840
  %v2105 = vpack.c.b16 %v1845, %v1841
  %v2106 = vpack.c.b16 %v1846, %v1842
  %v2107 = vpack.c.b16 %v1851, %v1847
  %v2108 = vpack.c.b16 %v1852, %v1848
  %v2109 = vpack.c.b16 %v1853, %v1849
  %v2110 = vpack.c.b16 %v1854, %v1850
  %v2111 = vpack.c.b16 %v1859, %v1855
  %v2112 = vpack.c.b16 %v1860, %v1856
  %v2113 = vpack.c.b16 %v1861, %v1857
  %v2114 = vpack.c.b16 %v1862, %v1858
  %v2115 = vpack.c.b16 %v1867, %v1863
  %v2116 = vpack.c.b16 %v1868, %v1864
  %v2117 = vpack.c.b16 %v1869, %v1865
  %v2118 = vpack.c.b16 %v1870, %v1866
  %v2119 = vpack.c.b16 %v1875, %v1871
  %v2120 = vpack.c.b16 %v1876, %v1872
  %v2121 = vpack.c.b16 %v1877, %v1873
  %v2122 = vpack.c.b16 %v1878, %v1874
  %v2123 = vpack.c.b16 %v1883, %v1879
  %v2124 = vpack.c.b16 %v1884, %v1880
  %v2125 = vpack.c.b16 %v1885, %v1881
  %v2126 = vpack.c.b16 %v1886, %v1882
  %v2127 = vpack.c.b16 %v1891, %v1887
  %v2128 = vpack.c.b16 %v1892, %v1888
  %v2129 = vpack.c.b16 %v1893, %v1889
  %v2130 = vpack.c.b16 %v1894, %v1890
  %v2131 = vpack.c.b16 %v1899, %v1895
  %v2132 = vpack.c.b16 %v1900, %v1896
  %v2133 = vpack.c.b16 %v1901, %v1897
  %v2134 = vpack.c.b16 %v1902, %v1898
  %v2135 = vpack.c.b16 %v1907, %v1903
  %v2136 = vpack.c.b16 %v1908, %v1904
  %v2137 = vpack.c.b16 %v1909, %v1905
  %v2138 = vpack.c.b16 %v1910, %v1906
  %v2139 = vpack.c.b16 %v1915, %v1911
  %v2140 = vpack.c.b16 %v1916, %v1912
  %v2141 = vpack.c.b16 %v1917, %v1913
  %v2142 = vpack.c.b16 %v1918, %v1914
  %v2143 = vpack.c.b16 %v1923, %v1919
  %v2144 = vpack.c.b16 %v1924, %v1920
  %v2145 = vpack.c.b16 %v1925, %v1921
  %v2146 = vpack.c.b16 %v1926, %v1922
  %v2147 = vpack.c.b16 %v1931, %v1927
  %v2148 = vpack.c.b16 %v1932, %v1928
  %v2149 = vpack.c.b16 %v1933, %v1929
  %v2150 = vpack.c.b16 %v1934, %v1930
  %v2151 = vpack.c.b16 %v1939, %v1935
  %v2152 = vpack.c.b16 %v1940, %v1936
  %v2153 = vpack.c.b16 %v1941, %v1937
  %v2154 = vpack.c.b16 %v1942, %v1938
  %v2155 = vpack.c.b16 %v1947, %v1943
  %v2156 = vpack.c.b16 %v1948, %v1944
  %v2157 = vpack.c.b16 %v1949, %v1945
  %v2158 = vpack.c.b16 %v1950, %v1946
  %v2159 = vpack.c.b16 %v1955, %v1951
  %v2160 = vpack.c.b16 %v1956, %v1952
  %v2161 = vpack.c.b16 %v1957, %v1953
  %v2162 = vpack.c.b16 %v1958, %v1954
  %v2163 = vpack.c.b16 %v1963, %v1959
  %v2164 = vpack.c.b16 %v1964, %v1960
  %v2165 = vpack.c.b16 %v1965, %v1961
  %v2166 = vpack.c.b16 %v1966, %v1962
  %v2167 = vpack.c.b16 %v1971, %v1967
  %v2168 = vpack.c.b16 %v1972, %v1968
  %v2169 = vpack.c.b16 %v1973, %v1969
  %v2170 = vpack.c.b16 %v1974, %v1970
  %v2171 = vpack.c.b16 %v1979, %v1975
  %v2172 = vpack.c.b16 %v1980, %v1976
  %v2173 = vpack.c.b16 %v1981, %v1977
  %v2174 = vpack.c.b16 %v1982, %v1978
  %2367 = vmatprep.subr.bf16.mxu0 %v2012
  %2368 = vmatpush1.bf16.msra.mxu0 %v2011
  %2369 = vmatprep.subr.bf16.mxu0 %v2008
  %2370 = vmatpush1.bf16.msra.mxu0 %v2007
  %2371 = vmatprep.subr.bf16.mxu0 %v2004
  %2372 = vmatpush1.bf16.msra.mxu0 %v2003
  %2373 = vmatprep.subr.bf16.mxu0 %v2000
  %2374 = vmatpush1.bf16.msra.mxu0 %v1999
  %2375 = vmatprep.subr.bf16.mxu0 %v1996
  %2376 = vmatpush1.bf16.msra.mxu0 %v1995
  %2377 = vmatprep.subr.bf16.mxu0 %v1992
  %2378 = vmatpush1.bf16.msra.mxu0 %v1991
  %2379 = vmatprep.subr.bf16.mxu0 %v1988
  %2380 = vmatpush1.bf16.msra.mxu0 %v1987
  %2381 = vmatprep.subr.bf16.mxu0 %v1984
  %2382 = vmatpush1.bf16.msra.mxu0 %v1983
  %2383 = vmatprep.subr.bf16.mxu0 %v2044
  %2384 = vmatpush2.bf16.msra.mxu0 %v2043
  %2385 = vmatprep.subr.bf16.mxu0 %v2040
  %2386 = vmatpush2.bf16.msra.mxu0 %v2039
  %2387 = vmatprep.subr.bf16.mxu0 %v2036
  %2388 = vmatpush2.bf16.msra.mxu0 %v2035
  %2389 = vmatprep.subr.bf16.mxu0 %v2032
  %2390 = vmatpush2.bf16.msra.mxu0 %v2031
  %2391 = vmatprep.subr.bf16.mxu0 %v2028
  %2392 = vmatpush2.bf16.msra.mxu0 %v2027
  %2393 = vmatprep.subr.bf16.mxu0 %v2024
  %2394 = vmatpush2.bf16.msra.mxu0 %v2023
  %2395 = vmatprep.subr.bf16.mxu0 %v2020
  %2396 = vmatpush2.bf16.msra.mxu0 %v2019
  %2397 = vmatprep.subr.bf16.mxu0 %v2016
  %2398 = vmatpush2.bf16.msra.mxu0 %v2015
  %2399 = vmatprep.mubr.bf16.mxu0 %v1188
  %2400 = vmatmul.mubr.bf16.gmra.mxu0 %v1187
  %v2401 = vpop.f32.mrf.mxu0
  %v2402 = vadd.f32 %v1390, %v2401
  %v2403 = vpop.f32.mrf.mxu0
  %v2404 = vadd.f32 %v1394, %v2403
  %v2405 = vpop.f32.mrf.mxu0
  %v2406 = vpop.f32.mrf.mxu0
  %2407 = vdwg.mxu0
  %2408 = vmatprep.subr.bf16.mxu0 %v2076
  %2409 = vmatpush1.bf16.msra.mxu0 %v2075
  %2410 = vmatprep.subr.bf16.mxu0 %v2072
  %2411 = vmatpush1.bf16.msra.mxu0 %v2071
  %2412 = vmatprep.subr.bf16.mxu0 %v2068
  %2413 = vmatpush1.bf16.msra.mxu0 %v2067
  %2414 = vmatprep.subr.bf16.mxu0 %v2064
  %2415 = vmatpush1.bf16.msra.mxu0 %v2063
  %2416 = vmatprep.subr.bf16.mxu0 %v2060
  %2417 = vmatpush1.bf16.msra.mxu0 %v2059
  %2418 = vmatprep.subr.bf16.mxu0 %v2056
  %2419 = vmatpush1.bf16.msra.mxu0 %v2055
  %2420 = vmatprep.subr.bf16.mxu0 %v2052
  %2421 = vmatpush1.bf16.msra.mxu0 %v2051
  %2422 = vmatprep.subr.bf16.mxu0 %v2048
  %2423 = vmatpush1.bf16.msra.mxu0 %v2047
  %2424 = vmatprep.subr.bf16.mxu0 %v2108
  %2425 = vmatpush2.bf16.msra.mxu0 %v2107
  %2426 = vmatprep.subr.bf16.mxu0 %v2104
  %2427 = vmatpush2.bf16.msra.mxu0 %v2103
  %2428 = vmatprep.subr.bf16.mxu0 %v2100
  %2429 = vmatpush2.bf16.msra.mxu0 %v2099
  %2430 = vmatprep.subr.bf16.mxu0 %v2096
  %2431 = vmatpush2.bf16.msra.mxu0 %v2095
  %2432 = vmatprep.subr.bf16.mxu0 %v2092
  %2433 = vmatpush2.bf16.msra.mxu0 %v2091
  %2434 = vmatprep.subr.bf16.mxu0 %v2088
  %2435 = vmatpush2.bf16.msra.mxu0 %v2087
  %2436 = vmatprep.subr.bf16.mxu0 %v2084
  %2437 = vmatpush2.bf16.msra.mxu0 %v2083
  %2438 = vmatprep.subr.bf16.mxu0 %v2080
  %2439 = vmatpush2.bf16.msra.mxu0 %v2079
  %2440 = vmatprep.mubr.bf16.mxu0 %v1190
  %2441 = vmatmul.mubr.bf16.gmra.mxu0 %v1189
  %v2442 = vpop.f32.mrf.mxu0
  %v2443 = vadd.f32 %v2402, %v2442
  %v2444 = vpop.f32.mrf.mxu0
  %v2445 = vadd.f32 %v2404, %v2444
  %v2446 = vpop.f32.mrf.mxu0
  %v2447 = vpop.f32.mrf.mxu0
  %2448 = vdwg.mxu0
  %2449 = vmatprep.subr.bf16.mxu0 %v2140
  %2450 = vmatpush1.bf16.msra.mxu0 %v2139
  %2451 = vmatprep.subr.bf16.mxu0 %v2136
  %2452 = vmatpush1.bf16.msra.mxu0 %v2135
  %2453 = vmatprep.subr.bf16.mxu0 %v2132
  %2454 = vmatpush1.bf16.msra.mxu0 %v2131
  %2455 = vmatprep.subr.bf16.mxu0 %v2128
  %2456 = vmatpush1.bf16.msra.mxu0 %v2127
  %2457 = vmatprep.subr.bf16.mxu0 %v2124
  %2458 = vmatpush1.bf16.msra.mxu0 %v2123
  %2459 = vmatprep.subr.bf16.mxu0 %v2120
  %2460 = vmatpush1.bf16.msra.mxu0 %v2119
  %2461 = vmatprep.subr.bf16.mxu0 %v2116
  %2462 = vmatpush1.bf16.msra.mxu0 %v2115
  %2463 = vmatprep.subr.bf16.mxu0 %v2112
  %2464 = vmatpush1.bf16.msra.mxu0 %v2111
  %2465 = vmatprep.subr.bf16.mxu0 %v2172
  %2466 = vmatpush2.bf16.msra.mxu0 %v2171
  %2467 = vmatprep.subr.bf16.mxu0 %v2168
  %2468 = vmatpush2.bf16.msra.mxu0 %v2167
  %2469 = vmatprep.subr.bf16.mxu0 %v2164
  %2470 = vmatpush2.bf16.msra.mxu0 %v2163
  %2471 = vmatprep.subr.bf16.mxu0 %v2160
  %2472 = vmatpush2.bf16.msra.mxu0 %v2159
  %2473 = vmatprep.subr.bf16.mxu0 %v2156
  %2474 = vmatpush2.bf16.msra.mxu0 %v2155
  %2475 = vmatprep.subr.bf16.mxu0 %v2152
  %2476 = vmatpush2.bf16.msra.mxu0 %v2151
  %2477 = vmatprep.subr.bf16.mxu0 %v2148
  %2478 = vmatpush2.bf16.msra.mxu0 %v2147
  %2479 = vmatprep.subr.bf16.mxu0 %v2144
  %2480 = vmatpush2.bf16.msra.mxu0 %v2143
  %2481 = vmatprep.mubr.bf16.mxu0 %v1192
  %2482 = vmatmul.mubr.bf16.gmra.mxu0 %v1191
  %v2483 = vpop.f32.mrf.mxu0
  %v2484 = vadd.f32 %v2443, %v2483
  %v2485 = vpop.f32.mrf.mxu0
  %v2486 = vadd.f32 %v2445, %v2485
  %v2487 = vpop.f32.mrf.mxu0
  %v2488 = vpop.f32.mrf.mxu0
  %2489 = vdwg.mxu0
  %2490 = vmatprep.subr.bf16.mxu0 %v2014
  %2491 = vmatpush1.bf16.msra.mxu0 %v2013
  %2492 = vmatprep.subr.bf16.mxu0 %v2010
  %2493 = vmatpush1.bf16.msra.mxu0 %v2009
  %2494 = vmatprep.subr.bf16.mxu0 %v2006
  %2495 = vmatpush1.bf16.msra.mxu0 %v2005
  %2496 = vmatprep.subr.bf16.mxu0 %v2002
  %2497 = vmatpush1.bf16.msra.mxu0 %v2001
  %2498 = vmatprep.subr.bf16.mxu0 %v1998
  %2499 = vmatpush1.bf16.msra.mxu0 %v1997
  %2500 = vmatprep.subr.bf16.mxu0 %v1994
  %2501 = vmatpush1.bf16.msra.mxu0 %v1993
  %2502 = vmatprep.subr.bf16.mxu0 %v1990
  %2503 = vmatpush1.bf16.msra.mxu0 %v1989
  %2504 = vmatprep.subr.bf16.mxu0 %v1986
  %2505 = vmatpush1.bf16.msra.mxu0 %v1985
  %2506 = vmatprep.subr.bf16.mxu0 %v2046
  %2507 = vmatpush2.bf16.msra.mxu0 %v2045
  %2508 = vmatprep.subr.bf16.mxu0 %v2042
  %2509 = vmatpush2.bf16.msra.mxu0 %v2041
  %2510 = vmatprep.subr.bf16.mxu0 %v2038
  %2511 = vmatpush2.bf16.msra.mxu0 %v2037
  %2512 = vmatprep.subr.bf16.mxu0 %v2034
  %2513 = vmatpush2.bf16.msra.mxu0 %v2033
  %2514 = vmatprep.subr.bf16.mxu0 %v2030
  %2515 = vmatpush2.bf16.msra.mxu0 %v2029
  %2516 = vmatprep.subr.bf16.mxu0 %v2026
  %2517 = vmatpush2.bf16.msra.mxu0 %v2025
  %2518 = vmatprep.subr.bf16.mxu0 %v2022
  %2519 = vmatpush2.bf16.msra.mxu0 %v2021
  %2520 = vmatprep.subr.bf16.mxu0 %v2018
  %2521 = vmatpush2.bf16.msra.mxu0 %v2017
  %2522 = vmatprep.mubr.bf16.mxu0 %v1188
  %2523 = vmatmul.mubr.bf16.gmra.mxu0 %v1187
  %v2524 = vpop.f32.mrf.mxu0
  %v2525 = vadd.f32 %v1398, %v2524
  %v2526 = vpop.f32.mrf.mxu0
  %v2527 = vadd.f32 %v1402, %v2526
  %v2528 = vpop.f32.mrf.mxu0
  %v2529 = vpop.f32.mrf.mxu0
  %2530 = vdwg.mxu0
  %2531 = vmatprep.subr.bf16.mxu0 %v2078
  %2532 = vmatpush1.bf16.msra.mxu0 %v2077
  %2533 = vmatprep.subr.bf16.mxu0 %v2074
  %2534 = vmatpush1.bf16.msra.mxu0 %v2073
  %2535 = vmatprep.subr.bf16.mxu0 %v2070
  %2536 = vmatpush1.bf16.msra.mxu0 %v2069
  %2537 = vmatprep.subr.bf16.mxu0 %v2066
  %2538 = vmatpush1.bf16.msra.mxu0 %v2065
  %2539 = vmatprep.subr.bf16.mxu0 %v2062
  %2540 = vmatpush1.bf16.msra.mxu0 %v2061
  %2541 = vmatprep.subr.bf16.mxu0 %v2058
  %2542 = vmatpush1.bf16.msra.mxu0 %v2057
  %2543 = vmatprep.subr.bf16.mxu0 %v2054
  %2544 = vmatpush1.bf16.msra.mxu0 %v2053
  %2545 = vmatprep.subr.bf16.mxu0 %v2050
  %2546 = vmatpush1.bf16.msra.mxu0 %v2049
  %2547 = vmatprep.subr.bf16.mxu0 %v2110
  %2548 = vmatpush2.bf16.msra.mxu0 %v2109
  %2549 = vmatprep.subr.bf16.mxu0 %v2106
  %2550 = vmatpush2.bf16.msra.mxu0 %v2105
  %2551 = vmatprep.subr.bf16.mxu0 %v2102
  %2552 = vmatpush2.bf16.msra.mxu0 %v2101
  %2553 = vmatprep.subr.bf16.mxu0 %v2098
  %2554 = vmatpush2.bf16.msra.mxu0 %v2097
  %2555 = vmatprep.subr.bf16.mxu0 %v2094
  %2556 = vmatpush2.bf16.msra.mxu0 %v2093
  %2557 = vmatprep.subr.bf16.mxu0 %v2090
  %2558 = vmatpush2.bf16.msra.mxu0 %v2089
  %2559 = vmatprep.subr.bf16.mxu0 %v2086
  %2560 = vmatpush2.bf16.msra.mxu0 %v2085
  %2561 = vmatprep.subr.bf16.mxu0 %v2082
  %2562 = vmatpush2.bf16.msra.mxu0 %v2081
  %2563 = vmatprep.mubr.bf16.mxu0 %v1190
  %2564 = vmatmul.mubr.bf16.gmra.mxu0 %v1189
  %v2565 = vpop.f32.mrf.mxu0
  %v2566 = vadd.f32 %v2525, %v2565
  %v2567 = vpop.f32.mrf.mxu0
  %v2568 = vadd.f32 %v2527, %v2567
  %v2569 = vpop.f32.mrf.mxu0
  %v2570 = vpop.f32.mrf.mxu0
  %2571 = vdwg.mxu0
  %2572 = vmatprep.subr.bf16.mxu0 %v2142
  %2573 = vmatpush1.bf16.msra.mxu0 %v2141
  %2574 = vmatprep.subr.bf16.mxu0 %v2138
  %2575 = vmatpush1.bf16.msra.mxu0 %v2137
  %2576 = vmatprep.subr.bf16.mxu0 %v2134
  %2577 = vmatpush1.bf16.msra.mxu0 %v2133
  %2578 = vmatprep.subr.bf16.mxu0 %v2130
  %2579 = vmatpush1.bf16.msra.mxu0 %v2129
  %2580 = vmatprep.subr.bf16.mxu0 %v2126
  %2581 = vmatpush1.bf16.msra.mxu0 %v2125
  %2582 = vmatprep.subr.bf16.mxu0 %v2122
  %2583 = vmatpush1.bf16.msra.mxu0 %v2121
  %2584 = vmatprep.subr.bf16.mxu0 %v2118
  %2585 = vmatpush1.bf16.msra.mxu0 %v2117
  %2586 = vmatprep.subr.bf16.mxu0 %v2114
  %2587 = vmatpush1.bf16.msra.mxu0 %v2113
  %2588 = vmatprep.subr.bf16.mxu0 %v2174
  %2589 = vmatpush2.bf16.msra.mxu0 %v2173
  %2590 = vmatprep.subr.bf16.mxu0 %v2170
  %2591 = vmatpush2.bf16.msra.mxu0 %v2169
  %2592 = vmatprep.subr.bf16.mxu0 %v2166
  %2593 = vmatpush2.bf16.msra.mxu0 %v2165
  %2594 = vmatprep.subr.bf16.mxu0 %v2162
  %2595 = vmatpush2.bf16.msra.mxu0 %v2161
  %2596 = vmatprep.subr.bf16.mxu0 %v2158
  %2597 = vmatpush2.bf16.msra.mxu0 %v2157
  %2598 = vmatprep.subr.bf16.mxu0 %v2154
  %2599 = vmatpush2.bf16.msra.mxu0 %v2153
  %2600 = vmatprep.subr.bf16.mxu0 %v2150
  %2601 = vmatpush2.bf16.msra.mxu0 %v2149
  %2602 = vmatprep.subr.bf16.mxu0 %v2146
  %2603 = vmatpush2.bf16.msra.mxu0 %v2145
  %2604 = vmatprep.mubr.bf16.mxu0 %v1192
  %2605 = vmatmul.mubr.bf16.gmra.mxu0 %v1191
  %v2606 = vpop.f32.mrf.mxu0
  %v2607 = vadd.f32 %v2566, %v2606
  %v2608 = vpop.f32.mrf.mxu0
  %v2609 = vadd.f32 %v2568, %v2608
  %v2610 = vpop.f32.mrf.mxu0
  %v2611 = vpop.f32.mrf.mxu0
  %2612 = vdwg.mxu0
  %v2613 = vtanh.pop %v2484
  %v2614 = vtanh.pop %v2486
  %v2615 = vtanh.pop %v2607
  %v2616 = vtanh.pop %v2609
  %v2617 = vpack.c.bf16 %v2613, %v2613
  %v2618 = vpack.c.bf16 %v2614, %v2614
  %v2619 = vpack.c.bf16 %v2615, %v2615
  %v2620 = vpack.c.bf16 %v2616, %v2616
  %v2621 = vld [vmem:[%s5] sm:$0xff]
  %v2622 = vld [vmem:[%s5 + $0x8] sm:$0xf]
  %v2623 = vld [vmem:[%s5 + $0xc] sm:$0xff]
  %v2624 = vld [vmem:[%s5 + $0x14] sm:$0xf]
  %v2625 = vld [vmem:[%s5 + $0x18] sm:$0xff]
  %v2626 = vld [vmem:[%s5 + $0x20] sm:$0xf]
  %v2627 = vld [vmem:[%s5 + $0x24] sm:$0xff]
  %v2628 = vld [vmem:[%s5 + $0x2c] sm:$0xf]
  %v2629 = vld [vmem:[%s5 + $0x30] sm:$0xff]
  %v2630 = vld [vmem:[%s5 + $0x38] sm:$0xf]
  %v2631 = vld [vmem:[%s5 + $0x3c] sm:$0xff]
  %v2632 = vld [vmem:[%s5 + $0x44] sm:$0xf]
  %v2633 = vld [vmem:[%s5 + $0x48] sm:$0xff]
  %v2634 = vld [vmem:[%s5 + $0x50] sm:$0xf]
  %v2635 = vld [vmem:[%s5 + $0x54] sm:$0xff]
  %v2636 = vld [vmem:[%s5 + $0x5c] sm:$0xf]
  %v2637 = vld [vmem:[%s5 + $0x60] sm:$0xff]
  %v2638 = vld [vmem:[%s5 + $0x68] sm:$0xf]
  %v2639 = vld [vmem:[%s5 + $0x6c] sm:$0xff]
  %v2640 = vld [vmem:[%s5 + $0x74] sm:$0xf]
  %v2641 = vld [vmem:[%s5 + $0x78] sm:$0xff]
  %v2642 = vld [vmem:[%s5 + $0x80] sm:$0xf]
  %v2643 = vld [vmem:[%s5 + $0x84] sm:$0xff]
  %v2644 = vld [vmem:[%s5 + $0x8c] sm:$0xf]
  %v2645 = vld [vmem:[%s5 + $0x90] sm:$0xff]
  %v2646 = vld [vmem:[%s5 + $0x98] sm:$0xf]
  %v2647 = vld [vmem:[%s5 + $0x9c] sm:$0xff]
  %v2648 = vld [vmem:[%s5 + $0xa4] sm:$0xf]
  %v2649 = vld [vmem:[%s5 + $0xa8] sm:$0xff]
  %v2650 = vld [vmem:[%s5 + $0xb0] sm:$0xf]
  %v2651 = vld [vmem:[%s5 + $0xb4] sm:$0xff]
  %v2652 = vld [vmem:[%s5 + $0xbc] sm:$0xf]
  %v2653 = vld [vmem:[%s5 + $0xc0] sm:$0xff]
  %v2654 = vld [vmem:[%s5 + $0xc8] sm:$0xf]
  %v2655 = vld [vmem:[%s5 + $0xcc] sm:$0xff]
  %v2656 = vld [vmem:[%s5 + $0xd4] sm:$0xf]
  %v2657 = vld [vmem:[%s5 + $0xd8] sm:$0xff]
  %v2658 = vld [vmem:[%s5 + $0xe0] sm:$0xf]
  %v2659 = vld [vmem:[%s5 + $0xe4] sm:$0xff]
  %v2660 = vld [vmem:[%s5 + $0xec] sm:$0xf]
  %v2661 = vld [vmem:[%s5 + $0xf0] sm:$0xff]
  %v2662 = vld [vmem:[%s5 + $0xf8] sm:$0xf]
  %v2663 = vld [vmem:[%s5 + $0xfc] sm:$0xff]
  %v2664 = vld [vmem:[%s5 + $0x104] sm:$0xf]
  %v2665 = vld [vmem:[%s5 + $0x108] sm:$0xff]
  %v2666 = vld [vmem:[%s5 + $0x110] sm:$0xf]
  %v2667 = vld [vmem:[%s5 + $0x114] sm:$0xff]
  %v2668 = vld [vmem:[%s5 + $0x11c] sm:$0xf]
  %v2669 = vld [vmem:[%s5 + $0x120] sm:$0xff]
  %v2670 = vld [vmem:[%s5 + $0x128] sm:$0xf]
  %v2671 = vld [vmem:[%s5 + $0x12c] sm:$0xff]
  %v2672 = vld [vmem:[%s5 + $0x134] sm:$0xf]
  %v2673 = vld [vmem:[%s5 + $0x138] sm:$0xff]
  %v2674 = vld [vmem:[%s5 + $0x140] sm:$0xf]
  %v2675 = vld [vmem:[%s5 + $0x144] sm:$0xff]
  %v2676 = vld [vmem:[%s5 + $0x14c] sm:$0xf]
  %v2677 = vld [vmem:[%s5 + $0x150] sm:$0xff]
  %v2678 = vld [vmem:[%s5 + $0x158] sm:$0xf]
  %v2679 = vld [vmem:[%s5 + $0x15c] sm:$0xff]
  %v2680 = vld [vmem:[%s5 + $0x164] sm:$0xf]
  %v2681 = vld [vmem:[%s5 + $0x168] sm:$0xff]
  %v2682 = vld [vmem:[%s5 + $0x170] sm:$0xf]
  %v2683 = vld [vmem:[%s5 + $0x174] sm:$0xff]
  %v2684 = vld [vmem:[%s5 + $0x17c] sm:$0xf]
  %v2685 = vld [vmem:[%s5 + $0x180] sm:$0xff]
  %v2686 = vld [vmem:[%s5 + $0x188] sm:$0xf]
  %v2687 = vld [vmem:[%s5 + $0x18c] sm:$0xff]
  %v2688 = vld [vmem:[%s5 + $0x194] sm:$0xf]
  %v2689 = vld [vmem:[%s5 + $0x198] sm:$0xff]
  %v2690 = vld [vmem:[%s5 + $0x1a0] sm:$0xf]
  %v2691 = vld [vmem:[%s5 + $0x1a4] sm:$0xff]
  %v2692 = vld [vmem:[%s5 + $0x1ac] sm:$0xf]
  %v2693 = vld [vmem:[%s5 + $0x1b0] sm:$0xff]
  %v2694 = vld [vmem:[%s5 + $0x1b8] sm:$0xf]
  %v2695 = vld [vmem:[%s5 + $0x1bc] sm:$0xff]
  %v2696 = vld [vmem:[%s5 + $0x1c4] sm:$0xf]
  %v2697 = vld [vmem:[%s5 + $0x1c8] sm:$0xff]
  %v2698 = vld [vmem:[%s5 + $0x1d0] sm:$0xf]
  %v2699 = vld [vmem:[%s5 + $0x1d4] sm:$0xff]
  %v2700 = vld [vmem:[%s5 + $0x1dc] sm:$0xf]
  %v2701 = vld [vmem:[%s5 + $0x1e0] sm:$0xff]
  %v2702 = vld [vmem:[%s5 + $0x1e8] sm:$0xf]
  %v2703 = vld [vmem:[%s5 + $0x1ec] sm:$0xff]
  %v2704 = vld [vmem:[%s5 + $0x1f4] sm:$0xf]
  %v2705 = vld [vmem:[%s5 + $0x1f8] sm:$0xff]
  %v2706 = vld [vmem:[%s5 + $0x200] sm:$0xf]
  %v2707 = vld [vmem:[%s5 + $0x204] sm:$0xff]
  %v2708 = vld [vmem:[%s5 + $0x20c] sm:$0xf]
  %v2709 = vld [vmem:[%s5 + $0x210] sm:$0xff]
  %v2710 = vld [vmem:[%s5 + $0x218] sm:$0xf]
  %v2711 = vld [vmem:[%s5 + $0x21c] sm:$0xff]
  %v2712 = vld [vmem:[%s5 + $0x224] sm:$0xf]
  %v2713 = vld [vmem:[%s5 + $0x228] sm:$0xff]
  %v2714 = vld [vmem:[%s5 + $0x230] sm:$0xf]
  %v2715 = vld [vmem:[%s5 + $0x234] sm:$0xff]
  %v2716 = vld [vmem:[%s5 + $0x23c] sm:$0xf]
  %v2717 = vld [vmem:[%s5 + $0x240] sm:$0xff]
  %v2718 = vld [vmem:[%s5 + $0x248] sm:$0xf]
  %v2719 = vld [vmem:[%s5 + $0x24c] sm:$0xff]
  %v2720 = vld [vmem:[%s5 + $0x254] sm:$0xf]
  %v2721 = vld [vmem:[%s5 + $0x258] sm:$0xff]
  %v2722 = vld [vmem:[%s5 + $0x260] sm:$0xf]
  %v2723 = vld [vmem:[%s5 + $0x264] sm:$0xff]
  %v2724 = vld [vmem:[%s5 + $0x26c] sm:$0xf]
  %v2725 = vld [vmem:[%s5 + $0x270] sm:$0xff]
  %v2726 = vld [vmem:[%s5 + $0x278] sm:$0xf]
  %v2727 = vld [vmem:[%s5 + $0x27c] sm:$0xff]
  %v2728 = vld [vmem:[%s5 + $0x284] sm:$0xf]
  %v2729 = vld [vmem:[%s5 + $0x288] sm:$0xff]
  %v2730 = vld [vmem:[%s5 + $0x290] sm:$0xf]
  %v2731 = vld [vmem:[%s5 + $0x294] sm:$0xff]
  %v2732 = vld [vmem:[%s5 + $0x29c] sm:$0xf]
  %v2733 = vld [vmem:[%s5 + $0x2a0] sm:$0xff]
  %v2734 = vld [vmem:[%s5 + $0x2a8] sm:$0xf]
  %v2735 = vld [vmem:[%s5 + $0x2ac] sm:$0xff]
  %v2736 = vld [vmem:[%s5 + $0x2b4] sm:$0xf]
  %v2737 = vld [vmem:[%s5 + $0x2b8] sm:$0xff]
  %v2738 = vld [vmem:[%s5 + $0x2c0] sm:$0xf]
  %v2739 = vld [vmem:[%s5 + $0x2c4] sm:$0xff]
  %v2740 = vld [vmem:[%s5 + $0x2cc] sm:$0xf]
  %v2741 = vld [vmem:[%s5 + $0x2d0] sm:$0xff]
  %v2742 = vld [vmem:[%s5 + $0x2d8] sm:$0xf]
  %v2743 = vld [vmem:[%s5 + $0x2dc] sm:$0xff]
  %v2744 = vld [vmem:[%s5 + $0x2e4] sm:$0xf]
  %v2745 = vld [vmem:[%s5 + $0x2e8] sm:$0xff]
  %v2746 = vld [vmem:[%s5 + $0x2f0] sm:$0xf]
  %v2747 = vld [vmem:[%s5 + $0x2f4] sm:$0xff]
  %v2748 = vld [vmem:[%s5 + $0x2fc] sm:$0xf]
  %v2877 = vunpack.c.l.b16 %v2621
  %v2878 = vunpack.c.h.b16 %v2621
  %v2879 = vunpack.c.l.b16 %v2622
  %v2880 = vunpack.c.l.b16 %v2623
  %v2881 = vunpack.c.h.b16 %v2623
  %v2882 = vunpack.c.l.b16 %v2624
  %v2883 = vunpack.c.l.b16 %v2625
  %v2884 = vunpack.c.h.b16 %v2625
  %v2885 = vunpack.c.l.b16 %v2626
  %v2886 = vunpack.c.l.b16 %v2627
  %v2887 = vunpack.c.h.b16 %v2627
  %v2888 = vunpack.c.l.b16 %v2628
  %v2889 = vunpack.c.l.b16 %v2629
  %v2890 = vunpack.c.h.b16 %v2629
  %v2891 = vunpack.c.l.b16 %v2630
  %v2892 = vunpack.c.l.b16 %v2631
  %v2893 = vunpack.c.h.b16 %v2631
  %v2894 = vunpack.c.l.b16 %v2632
  %v2895 = vunpack.c.l.b16 %v2633
  %v2896 = vunpack.c.h.b16 %v2633
  %v2897 = vunpack.c.l.b16 %v2634
  %v2898 = vunpack.c.l.b16 %v2635
  %v2899 = vunpack.c.h.b16 %v2635
  %v2900 = vunpack.c.l.b16 %v2636
  %v2901 = vunpack.c.l.b16 %v2637
  %v2902 = vunpack.c.h.b16 %v2637
  %v2903 = vunpack.c.l.b16 %v2638
  %v2904 = vunpack.c.l.b16 %v2639
  %v2905 = vunpack.c.h.b16 %v2639
  %v2906 = vunpack.c.l.b16 %v2640
  %v2907 = vunpack.c.l.b16 %v2641
  %v2908 = vunpack.c.h.b16 %v2641
  %v2909 = vunpack.c.l.b16 %v2642
  %v2910 = vunpack.c.l.b16 %v2643
  %v2911 = vunpack.c.h.b16 %v2643
  %v2912 = vunpack.c.l.b16 %v2644
  %v2913 = vunpack.c.l.b16 %v2645
  %v2914 = vunpack.c.h.b16 %v2645
  %v2915 = vunpack.c.l.b16 %v2646
  %v2916 = vunpack.c.l.b16 %v2647
  %v2917 = vunpack.c.h.b16 %v2647
  %v2918 = vunpack.c.l.b16 %v2648
  %v2919 = vunpack.c.l.b16 %v2649
  %v2920 = vunpack.c.h.b16 %v2649
  %v2921 = vunpack.c.l.b16 %v2650
  %v2922 = vunpack.c.l.b16 %v2651
  %v2923 = vunpack.c.h.b16 %v2651
  %v2924 = vunpack.c.l.b16 %v2652
  %v2925 = vunpack.c.l.b16 %v2653
  %v2926 = vunpack.c.h.b16 %v2653
  %v2927 = vunpack.c.l.b16 %v2654
  %v2928 = vunpack.c.l.b16 %v2655
  %v2929 = vunpack.c.h.b16 %v2655
  %v2930 = vunpack.c.l.b16 %v2656
  %v2931 = vunpack.c.l.b16 %v2657
  %v2932 = vunpack.c.h.b16 %v2657
  %v2933 = vunpack.c.l.b16 %v2658
  %v2934 = vunpack.c.l.b16 %v2659
  %v2935 = vunpack.c.h.b16 %v2659
  %v2936 = vunpack.c.l.b16 %v2660
  %v2937 = vunpack.c.l.b16 %v2661
  %v2938 = vunpack.c.h.b16 %v2661
  %v2939 = vunpack.c.l.b16 %v2662
  %v2940 = vunpack.c.l.b16 %v2663
  %v2941 = vunpack.c.h.b16 %v2663
  %v2942 = vunpack.c.l.b16 %v2664
  %v2943 = vunpack.c.l.b16 %v2665
  %v2944 = vunpack.c.h.b16 %v2665
  %v2945 = vunpack.c.l.b16 %v2666
  %v2946 = vunpack.c.l.b16 %v2667
  %v2947 = vunpack.c.h.b16 %v2667
  %v2948 = vunpack.c.l.b16 %v2668
  %v2949 = vunpack.c.l.b16 %v2669
  %v2950 = vunpack.c.h.b16 %v2669
  %v2951 = vunpack.c.l.b16 %v2670
  %v2952 = vunpack.c.l.b16 %v2671
  %v2953 = vunpack.c.h.b16 %v2671
  %v2954 = vunpack.c.l.b16 %v2672
  %v2955 = vunpack.c.l.b16 %v2673
  %v2956 = vunpack.c.h.b16 %v2673
  %v2957 = vunpack.c.l.b16 %v2674
  %v2958 = vunpack.c.l.b16 %v2675
  %v2959 = vunpack.c.h.b16 %v2675
  %v2960 = vunpack.c.l.b16 %v2676
  %v2961 = vunpack.c.l.b16 %v2677
  %v2962 = vunpack.c.h.b16 %v2677
  %v2963 = vunpack.c.l.b16 %v2678
  %v2964 = vunpack.c.l.b16 %v2679
  %v2965 = vunpack.c.h.b16 %v2679
  %v2966 = vunpack.c.l.b16 %v2680
  %v2967 = vunpack.c.l.b16 %v2681
  %v2968 = vunpack.c.h.b16 %v2681
  %v2969 = vunpack.c.l.b16 %v2682
  %v2970 = vunpack.c.l.b16 %v2683
  %v2971 = vunpack.c.h.b16 %v2683
  %v2972 = vunpack.c.l.b16 %v2684
  %v2973 = vunpack.c.l.b16 %v2685
  %v2974 = vunpack.c.h.b16 %v2685
  %v2975 = vunpack.c.l.b16 %v2686
  %v2976 = vunpack.c.l.b16 %v2687
  %v2977 = vunpack.c.h.b16 %v2687
  %v2978 = vunpack.c.l.b16 %v2688
  %v2979 = vunpack.c.l.b16 %v2689
  %v2980 = vunpack.c.h.b16 %v2689
  %v2981 = vunpack.c.l.b16 %v2690
  %v2982 = vunpack.c.l.b16 %v2691
  %v2983 = vunpack.c.h.b16 %v2691
  %v2984 = vunpack.c.l.b16 %v2692
  %v2985 = vunpack.c.l.b16 %v2693
  %v2986 = vunpack.c.h.b16 %v2693
  %v2987 = vunpack.c.l.b16 %v2694
  %v2988 = vunpack.c.l.b16 %v2695
  %v2989 = vunpack.c.h.b16 %v2695
  %v2990 = vunpack.c.l.b16 %v2696
  %v2991 = vunpack.c.l.b16 %v2697
  %v2992 = vunpack.c.h.b16 %v2697
  %v2993 = vunpack.c.l.b16 %v2698
  %v2994 = vunpack.c.l.b16 %v2699
  %v2995 = vunpack.c.h.b16 %v2699
  %v2996 = vunpack.c.l.b16 %v2700
  %v2997 = vunpack.c.l.b16 %v2701
  %v2998 = vunpack.c.h.b16 %v2701
  %v2999 = vunpack.c.l.b16 %v2702
  %v3000 = vunpack.c.l.b16 %v2703
  %v3001 = vunpack.c.h.b16 %v2703
  %v3002 = vunpack.c.l.b16 %v2704
  %v3003 = vunpack.c.l.b16 %v2705
  %v3004 = vunpack.c.h.b16 %v2705
  %v3005 = vunpack.c.l.b16 %v2706
  %v3006 = vunpack.c.l.b16 %v2707
  %v3007 = vunpack.c.h.b16 %v2707
  %v3008 = vunpack.c.l.b16 %v2708
  %v3009 = vunpack.c.l.b16 %v2709
  %v3010 = vunpack.c.h.b16 %v2709
  %v3011 = vunpack.c.l.b16 %v2710
  %v3012 = vunpack.c.l.b16 %v2711
  %v3013 = vunpack.c.h.b16 %v2711
  %v3014 = vunpack.c.l.b16 %v2712
  %v3015 = vunpack.c.l.b16 %v2713
  %v3016 = vunpack.c.h.b16 %v2713
  %v3017 = vunpack.c.l.b16 %v2714
  %v3018 = vunpack.c.l.b16 %v2715
  %v3019 = vunpack.c.h.b16 %v2715
  %v3020 = vunpack.c.l.b16 %v2716
  %v3021 = vunpack.c.l.b16 %v2717
  %v3022 = vunpack.c.h.b16 %v2717
  %v3023 = vunpack.c.l.b16 %v2718
  %v3024 = vunpack.c.l.b16 %v2719
  %v3025 = vunpack.c.h.b16 %v2719
  %v3026 = vunpack.c.l.b16 %v2720
  %v3027 = vunpack.c.l.b16 %v2721
  %v3028 = vunpack.c.h.b16 %v2721
  %v3029 = vunpack.c.l.b16 %v2722
  %v3030 = vunpack.c.l.b16 %v2723
  %v3031 = vunpack.c.h.b16 %v2723
  %v3032 = vunpack.c.l.b16 %v2724
  %v3033 = vunpack.c.l.b16 %v2725
  %v3034 = vunpack.c.h.b16 %v2725
  %v3035 = vunpack.c.l.b16 %v2726
  %v3036 = vunpack.c.l.b16 %v2727
  %v3037 = vunpack.c.h.b16 %v2727
  %v3038 = vunpack.c.l.b16 %v2728
  %v3039 = vunpack.c.l.b16 %v2729
  %v3040 = vunpack.c.h.b16 %v2729
  %v3041 = vunpack.c.l.b16 %v2730
  %v3042 = vunpack.c.l.b16 %v2731
  %v3043 = vunpack.c.h.b16 %v2731
  %v3044 = vunpack.c.l.b16 %v2732
  %v3045 = vunpack.c.l.b16 %v2733
  %v3046 = vunpack.c.h.b16 %v2733
  %v3047 = vunpack.c.l.b16 %v2734
  %v3048 = vunpack.c.l.b16 %v2735
  %v3049 = vunpack.c.h.b16 %v2735
  %v3050 = vunpack.c.l.b16 %v2736
  %v3051 = vunpack.c.l.b16 %v2737
  %v3052 = vunpack.c.h.b16 %v2737
  %v3053 = vunpack.c.l.b16 %v2738
  %v3054 = vunpack.c.l.b16 %v2739
  %v3055 = vunpack.c.h.b16 %v2739
  %v3056 = vunpack.c.l.b16 %v2740
  %v3057 = vunpack.c.l.b16 %v2741
  %v3058 = vunpack.c.h.b16 %v2741
  %v3059 = vunpack.c.l.b16 %v2742
  %v3060 = vunpack.c.l.b16 %v2743
  %v3061 = vunpack.c.h.b16 %v2743
  %v3062 = vunpack.c.l.b16 %v2744
  %v3063 = vunpack.c.l.b16 %v2745
  %v3064 = vunpack.c.h.b16 %v2745
  %v3065 = vunpack.c.l.b16 %v2746
  %v3066 = vunpack.c.l.b16 %v2747
  %v3067 = vunpack.c.h.b16 %v2747
  %v3068 = vunpack.c.l.b16 %v2748
  %v3069 = vpack.c.b16 %v2880, %v2877
  %v3070 = vpack.c.b16 %v2881, %v2878
  %v3071 = vpack.c.b16 %v2882, %v2879
  %v3072 = vpack.c.b16 %v2886, %v2883
  %v3073 = vpack.c.b16 %v2887, %v2884
  %v3074 = vpack.c.b16 %v2888, %v2885
  %v3075 = vpack.c.b16 %v2892, %v2889
  %v3076 = vpack.c.b16 %v2893, %v2890
  %v3077 = vpack.c.b16 %v2894, %v2891
  %v3078 = vpack.c.b16 %v2898, %v2895
  %v3079 = vpack.c.b16 %v2899, %v2896
  %v3080 = vpack.c.b16 %v2900, %v2897
  %v3081 = vpack.c.b16 %v2904, %v2901
  %v3082 = vpack.c.b16 %v2905, %v2902
  %v3083 = vpack.c.b16 %v2906, %v2903
  %v3084 = vpack.c.b16 %v2910, %v2907
  %v3085 = vpack.c.b16 %v2911, %v2908
  %v3086 = vpack.c.b16 %v2912, %v2909
  %v3087 = vpack.c.b16 %v2916, %v2913
  %v3088 = vpack.c.b16 %v2917, %v2914
  %v3089 = vpack.c.b16 %v2918, %v2915
  %v3090 = vpack.c.b16 %v2922, %v2919
  %v3091 = vpack.c.b16 %v2923, %v2920
  %v3092 = vpack.c.b16 %v2924, %v2921
  %v3093 = vpack.c.b16 %v2928, %v2925
  %v3094 = vpack.c.b16 %v2929, %v2926
  %v3095 = vpack.c.b16 %v2930, %v2927
  %v3096 = vpack.c.b16 %v2934, %v2931
  %v3097 = vpack.c.b16 %v2935, %v2932
  %v3098 = vpack.c.b16 %v2936, %v2933
  %v3099 = vpack.c.b16 %v2940, %v2937
  %v3100 = vpack.c.b16 %v2941, %v2938
  %v3101 = vpack.c.b16 %v2942, %v2939
  %v3102 = vpack.c.b16 %v2946, %v2943
  %v3103 = vpack.c.b16 %v2947, %v2944
  %v3104 = vpack.c.b16 %v2948, %v2945
  %v3105 = vpack.c.b16 %v2952, %v2949
  %v3106 = vpack.c.b16 %v2953, %v2950
  %v3107 = vpack.c.b16 %v2954, %v2951
  %v3108 = vpack.c.b16 %v2958, %v2955
  %v3109 = vpack.c.b16 %v2959, %v2956
  %v3110 = vpack.c.b16 %v2960, %v2957
  %v3111 = vpack.c.b16 %v2964, %v2961
  %v3112 = vpack.c.b16 %v2965, %v2962
  %v3113 = vpack.c.b16 %v2966, %v2963
  %v3114 = vpack.c.b16 %v2970, %v2967
  %v3115 = vpack.c.b16 %v2971, %v2968
  %v3116 = vpack.c.b16 %v2972, %v2969
  %v3117 = vpack.c.b16 %v2976, %v2973
  %v3118 = vpack.c.b16 %v2977, %v2974
  %v3119 = vpack.c.b16 %v2978, %v2975
  %v3120 = vpack.c.b16 %v2982, %v2979
  %v3121 = vpack.c.b16 %v2983, %v2980
  %v3122 = vpack.c.b16 %v2984, %v2981
  %v3123 = vpack.c.b16 %v2988, %v2985
  %v3124 = vpack.c.b16 %v2989, %v2986
  %v3125 = vpack.c.b16 %v2990, %v2987
  %v3126 = vpack.c.b16 %v2994, %v2991
  %v3127 = vpack.c.b16 %v2995, %v2992
  %v3128 = vpack.c.b16 %v2996, %v2993
  %v3129 = vpack.c.b16 %v3000, %v2997
  %v3130 = vpack.c.b16 %v3001, %v2998
  %v3131 = vpack.c.b16 %v3002, %v2999
  %v3132 = vpack.c.b16 %v3006, %v3003
  %v3133 = vpack.c.b16 %v3007, %v3004
  %v3134 = vpack.c.b16 %v3008, %v3005
  %v3135 = vpack.c.b16 %v3012, %v3009
  %v3136 = vpack.c.b16 %v3013, %v3010
  %v3137 = vpack.c.b16 %v3014, %v3011
  %v3138 = vpack.c.b16 %v3018, %v3015
  %v3139 = vpack.c.b16 %v3019, %v3016
  %v3140 = vpack.c.b16 %v3020, %v3017
  %v3141 = vpack.c.b16 %v3024, %v3021
  %v3142 = vpack.c.b16 %v3025, %v3022
  %v3143 = vpack.c.b16 %v3026, %v3023
  %v3144 = vpack.c.b16 %v3030, %v3027
  %v3145 = vpack.c.b16 %v3031, %v3028
  %v3146 = vpack.c.b16 %v3032, %v3029
  %v3147 = vpack.c.b16 %v3036, %v3033
  %v3148 = vpack.c.b16 %v3037, %v3034
  %v3149 = vpack.c.b16 %v3038, %v3035
  %v3150 = vpack.c.b16 %v3042, %v3039
  %v3151 = vpack.c.b16 %v3043, %v3040
  %v3152 = vpack.c.b16 %v3044, %v3041
  %v3153 = vpack.c.b16 %v3048, %v3045
  %v3154 = vpack.c.b16 %v3049, %v3046
  %v3155 = vpack.c.b16 %v3050, %v3047
  %v3156 = vpack.c.b16 %v3054, %v3051
  %v3157 = vpack.c.b16 %v3055, %v3052
  %v3158 = vpack.c.b16 %v3056, %v3053
  %v3159 = vpack.c.b16 %v3060, %v3057
  %v3160 = vpack.c.b16 %v3061, %v3058
  %v3161 = vpack.c.b16 %v3062, %v3059
  %v3162 = vpack.c.b16 %v3066, %v3063
  %v3163 = vpack.c.b16 %v3067, %v3064
  %v3164 = vpack.c.b16 %v3068, %v3065
  %3261 = vmatprep.subr.bf16.mxu0 %v3091
  %3262 = vmatpush1.bf16.msra.mxu0 %v3090
  %3263 = vmatprep.subr.bf16.mxu0 %v3088
  %3264 = vmatpush1.bf16.msra.mxu0 %v3087
  %3265 = vmatprep.subr.bf16.mxu0 %v3085
  %3266 = vmatpush1.bf16.msra.mxu0 %v3084
  %3267 = vmatprep.subr.bf16.mxu0 %v3082
  %3268 = vmatpush1.bf16.msra.mxu0 %v3081
  %3269 = vmatprep.subr.bf16.mxu0 %v3079
  %3270 = vmatpush1.bf16.msra.mxu0 %v3078
  %3271 = vmatprep.subr.bf16.mxu0 %v3076
  %3272 = vmatpush1.bf16.msra.mxu0 %v3075
  %3273 = vmatprep.subr.bf16.mxu0 %v3073
  %3274 = vmatpush1.bf16.msra.mxu0 %v3072
  %3275 = vmatprep.subr.bf16.mxu0 %v3070
  %3276 = vmatpush1.bf16.msra.mxu0 %v3069
  %3277 = vmatprep.subr.bf16.mxu0 %v3115
  %3278 = vmatpush2.bf16.msra.mxu0 %v3114
  %3279 = vmatprep.subr.bf16.mxu0 %v3112
  %3280 = vmatpush2.bf16.msra.mxu0 %v3111
  %3281 = vmatprep.subr.bf16.mxu0 %v3109
  %3282 = vmatpush2.bf16.msra.mxu0 %v3108
  %3283 = vmatprep.subr.bf16.mxu0 %v3106
  %3284 = vmatpush2.bf16.msra.mxu0 %v3105
  %3285 = vmatprep.subr.bf16.mxu0 %v3103
  %3286 = vmatpush2.bf16.msra.mxu0 %v3102
  %3287 = vmatprep.subr.bf16.mxu0 %v3100
  %3288 = vmatpush2.bf16.msra.mxu0 %v3099
  %3289 = vmatprep.subr.bf16.mxu0 %v3097
  %3290 = vmatpush2.bf16.msra.mxu0 %v3096
  %3291 = vmatprep.subr.bf16.mxu0 %v3094
  %3292 = vmatpush2.bf16.msra.mxu0 %v3093
  %3293 = vmatprep.mubr.bf16.mxu0 %v2618
  %3294 = vmatmul.mubr.bf16.gmra.mxu0 %v2617
  %v3295 = vpop.f32.mrf.mxu0
  %v3296 = vadd.f32 0.0, %v3295
  %v3297 = vpop.f32.mrf.mxu0
  %v3298 = vadd.f32 0.0, %v3297
  %v3299 = vpop.f32.mrf.mxu0
  %v3300 = vpop.f32.mrf.mxu0
  %3301 = vdwg.mxu0
  %3302 = vmatprep.subr.bf16.mxu0 %v3139
  %3303 = vmatpush1.bf16.msra.mxu0 %v3138
  %3304 = vmatprep.subr.bf16.mxu0 %v3136
  %3305 = vmatpush1.bf16.msra.mxu0 %v3135
  %3306 = vmatprep.subr.bf16.mxu0 %v3133
  %3307 = vmatpush1.bf16.msra.mxu0 %v3132
  %3308 = vmatprep.subr.bf16.mxu0 %v3130
  %3309 = vmatpush1.bf16.msra.mxu0 %v3129
  %3310 = vmatprep.subr.bf16.mxu0 %v3127
  %3311 = vmatpush1.bf16.msra.mxu0 %v3126
  %3312 = vmatprep.subr.bf16.mxu0 %v3124
  %3313 = vmatpush1.bf16.msra.mxu0 %v3123
  %3314 = vmatprep.subr.bf16.mxu0 %v3121
  %3315 = vmatpush1.bf16.msra.mxu0 %v3120
  %3316 = vmatprep.subr.bf16.mxu0 %v3118
  %3317 = vmatpush1.bf16.msra.mxu0 %v3117
  %3318 = vmatprep.subr.bf16.mxu0 %v3163
  %3319 = vmatpush2.bf16.msra.mxu0 %v3162
  %3320 = vmatprep.subr.bf16.mxu0 %v3160
  %3321 = vmatpush2.bf16.msra.mxu0 %v3159
  %3322 = vmatprep.subr.bf16.mxu0 %v3157
  %3323 = vmatpush2.bf16.msra.mxu0 %v3156
  %3324 = vmatprep.subr.bf16.mxu0 %v3154
  %3325 = vmatpush2.bf16.msra.mxu0 %v3153
  %3326 = vmatprep.subr.bf16.mxu0 %v3151
  %3327 = vmatpush2.bf16.msra.mxu0 %v3150
  %3328 = vmatprep.subr.bf16.mxu0 %v3148
  %3329 = vmatpush2.bf16.msra.mxu0 %v3147
  %3330 = vmatprep.subr.bf16.mxu0 %v3145
  %3331 = vmatpush2.bf16.msra.mxu0 %v3144
  %3332 = vmatprep.subr.bf16.mxu0 %v3142
  %3333 = vmatpush2.bf16.msra.mxu0 %v3141
  %3334 = vmatprep.mubr.bf16.mxu0 %v2620
  %3335 = vmatmul.mubr.bf16.gmra.mxu0 %v2619
  %v3336 = vpop.f32.mrf.mxu0
  %v3337 = vadd.f32 %v3296, %v3336
  %v3338 = vpop.f32.mrf.mxu0
  %v3339 = vadd.f32 %v3298, %v3338
  %v3340 = vpop.f32.mrf.mxu0
  %v3341 = vpop.f32.mrf.mxu0
  %3342 = vdwg.mxu0
  %3343 = vmatprep.subr.bf16.mxu0 0
  %3344 = vmatpush1.bf16.msra.mxu0 %v3092
  %3345 = vmatprep.subr.bf16.mxu0 0
  %3346 = vmatpush1.bf16.msra.mxu0 %v3089
  %3347 = vmatprep.subr.bf16.mxu0 0
  %3348 = vmatpush1.bf16.msra.mxu0 %v3086
  %3349 = vmatprep.subr.bf16.mxu0 0
  %3350 = vmatpush1.bf16.msra.mxu0 %v3083
  %3351 = vmatprep.subr.bf16.mxu0 0
  %3352 = vmatpush1.bf16.msra.mxu0 %v3080
  %3353 = vmatprep.subr.bf16.mxu0 0
  %3354 = vmatpush1.bf16.msra.mxu0 %v3077
  %3355 = vmatprep.subr.bf16.mxu0 0
  %3356 = vmatpush1.bf16.msra.mxu0 %v3074
  %3357 = vmatprep.subr.bf16.mxu0 0
  %3358 = vmatpush1.bf16.msra.mxu0 %v3071
  %3359 = vmatprep.subr.bf16.mxu0 0
  %3360 = vmatpush2.bf16.msra.mxu0 %v3116
  %3361 = vmatprep.subr.bf16.mxu0 0
  %3362 = vmatpush2.bf16.msra.mxu0 %v3113
  %3363 = vmatprep.subr.bf16.mxu0 0
  %3364 = vmatpush2.bf16.msra.mxu0 %v3110
  %3365 = vmatprep.subr.bf16.mxu0 0
  %3366 = vmatpush2.bf16.msra.mxu0 %v3107
  %3367 = vmatprep.subr.bf16.mxu0 0
  %3368 = vmatpush2.bf16.msra.mxu0 %v3104
  %3369 = vmatprep.subr.bf16.mxu0 0
  %3370 = vmatpush2.bf16.msra.mxu0 %v3101
  %3371 = vmatprep.subr.bf16.mxu0 0
  %3372 = vmatpush2.bf16.msra.mxu0 %v3098
  %3373 = vmatprep.subr.bf16.mxu0 0
  %3374 = vmatpush2.bf16.msra.mxu0 %v3095
  %3375 = vmatprep.mubr.bf16.mxu0 %v2618
  %3376 = vmatmul.mubr.bf16.gmra.mxu0 %v2617
  %v3377 = vpop.f32.mrf.mxu0
  %v3378 = vadd.f32 0.0, %v3377
  %v3379 = vpop.f32.mrf.mxu0
  %v3380 = vpop.f32.mrf.mxu0
  %v3381 = vpop.f32.mrf.mxu0
  %3382 = vdwg.mxu0
  %3383 = vmatprep.subr.bf16.mxu0 0
  %3384 = vmatpush1.bf16.msra.mxu0 %v3140
  %3385 = vmatprep.subr.bf16.mxu0 0
  %3386 = vmatpush1.bf16.msra.mxu0 %v3137
  %3387 = vmatprep.subr.bf16.mxu0 0
  %3388 = vmatpush1.bf16.msra.mxu0 %v3134
  %3389 = vmatprep.subr.bf16.mxu0 0
  %3390 = vmatpush1.bf16.msra.mxu0 %v3131
  %3391 = vmatprep.subr.bf16.mxu0 0
  %3392 = vmatpush1.bf16.msra.mxu0 %v3128
  %3393 = vmatprep.subr.bf16.mxu0 0
  %3394 = vmatpush1.bf16.msra.mxu0 %v3125
  %3395 = vmatprep.subr.bf16.mxu0 0
  %3396 = vmatpush1.bf16.msra.mxu0 %v3122
  %3397 = vmatprep.subr.bf16.mxu0 0
  %3398 = vmatpush1.bf16.msra.mxu0 %v3119
  %3399 = vmatprep.subr.bf16.mxu0 0
  %3400 = vmatpush2.bf16.msra.mxu0 %v3164
  %3401 = vmatprep.subr.bf16.mxu0 0
  %3402 = vmatpush2.bf16.msra.mxu0 %v3161
  %3403 = vmatprep.subr.bf16.mxu0 0
  %3404 = vmatpush2.bf16.msra.mxu0 %v3158
  %3405 = vmatprep.subr.bf16.mxu0 0
  %3406 = vmatpush2.bf16.msra.mxu0 %v3155
  %3407 = vmatprep.subr.bf16.mxu0 0
  %3408 = vmatpush2.bf16.msra.mxu0 %v3152
  %3409 = vmatprep.subr.bf16.mxu0 0
  %3410 = vmatpush2.bf16.msra.mxu0 %v3149
  %3411 = vmatprep.subr.bf16.mxu0 0
  %3412 = vmatpush2.bf16.msra.mxu0 %v3146
  %3413 = vmatprep.subr.bf16.mxu0 0
  %3414 = vmatpush2.bf16.msra.mxu0 %v3143
  %3415 = vmatprep.mubr.bf16.mxu0 %v2620
  %3416 = vmatmul.mubr.bf16.gmra.mxu0 %v2619
  %v3417 = vpop.f32.mrf.mxu0
  %v3418 = vadd.f32 %v3378, %v3417
  %v3419 = vpop.f32.mrf.mxu0
  %v3420 = vpop.f32.mrf.mxu0
  %v3421 = vpop.f32.mrf.mxu0
  %3422 = vdwg.mxu0
  %3423 = vst [vmem:[%s6] sm:$0xff] %v3337
  %3424 = vst [vmem:[%s6 + $0x8] sm:$0xff] %v3339
  %3425 = vst [vmem:[%s6 + $0x10] sm:$0xff] %v3418
  %v3426 = vrot.slane %v3337, 4
  %v3427 = vadd.f32 %v3337, %v3426
  %v3428 = vrot.slane %v3427, 2
  %v3429 = vadd.f32 %v3427, %v3428
  %v3430 = vrot.slane %v3429, 1
  %v3431 = vadd.f32 %v3429, %v3430
  %v3432 = vrot.slane %v3339, 4
  %v3433 = vadd.f32 %v3339, %v3432
  %v3434 = vrot.slane %v3433, 2
  %v3435 = vadd.f32 %v3433, %v3434
  %v3436 = vrot.slane %v3435, 1
  %v3437 = vadd.f32 %v3435, %v3436
  %v3438 = vrot.slane %v3418, 4
  %v3439 = vadd.f32 %v3418, %v3438
  %v3440 = vrot.slane %v3439, 2
  %v3441 = vadd.f32 %v3439, %v3440
  %v3442 = vrot.slane %v3441, 1
  %v3443 = vadd.f32 %v3441, %v3442
  %v3444 = vmul.f32 %v3337, %v3337
  %v3445 = vmul.f32 %v3339, %v3339
  %v3446 = vmul.f32 %v3418, %v3418
  %v3447 = vrot.slane %v3444, 4
  %v3448 = vadd.f32 %v3444, %v3447
  %v3449 = vrot.slane %v3448, 2
  %v3450 = vadd.f32 %v3448, %v3449
  %v3451 = vrot.slane %v3450, 1
  %v3452 = vadd.f32 %v3450, %v3451
  %v3453 = vrot.slane %v3445, 4
  %v3454 = vadd.f32 %v3445, %v3453
  %v3455 = vrot.slane %v3454, 2
  %v3456 = vadd.f32 %v3454, %v3455
  %v3457 = vrot.slane %v3456, 1
  %v3458 = vadd.f32 %v3456, %v3457
  %v3459 = vrot.slane %v3446, 4
  %v3460 = vadd.f32 %v3446, %v3459
  %v3461 = vrot.slane %v3460, 2
  %v3462 = vadd.f32 %v3460, %v3461
  %v3463 = vrot.slane %v3462, 1
  %v3464 = vadd.f32 %v3462, %v3463
  %vm3465 = vcmask 1040384
  %v3466 = vsel %vm3465, %v3431, %v3452
  %v3467 = vsel %vm3465, %v3437, %v3458
  %v3468 = vsel %vm3465, %v3443, %v3464
  %v3472 = vcombine.low %v3466, %v3467
  %v3474 = vunpack.c.l.s4 1983009808
  %v3475 = vunpack.c.0.s8 %v3474
  %v3476 = vlaneseq
  %v3477 = vshrl.u32 %v3476, 7
  %v3478 = vsub.s32 %v3475, %v3477
  %v3479 = vrot.slane %v3472, %v3478
  %v3481 = vunpack.c.l.s4 1983009808
  %v3482 = vunpack.c.0.s8 %v3481
  %v3483 = vlaneseq
  %v3484 = vshrl.u32 %v3483, 7
  %v3485 = vsub.s32 %v3482, %v3484
  %v3486 = vrot.slane %v3468, %v3485
  %v3487 = vcombine.low %v3479, %v3486
  %3489 = vst [vmem:[%s7] sm:$0x3f] %v3487
  // Predicated region
  $region26: #{classifier_forward.2} parent=0 // pred_check
    _
  $region27: #{classifier_forward.2} parent=0 // pred_check_branch
    %3491 = sbr.rel (0) target = $region29
  $region28: #{classifier_forward.2} parent=0 // pred_region
    _
  $region29: #{classifier_forward.2} parent=0 // pred_fallthru
    _
  // Predicated region
  $region30: #{classifier_forward.2} parent=0 // pred_check
    _
  $region31: #{classifier_forward.2} parent=0 // pred_check_branch
    %3493 = sbr.rel (0) target = $region33
  $region32: #{classifier_forward.2} parent=0 // pred_region
    _
  $region33: #{classifier_forward.2} parent=0 // pred_fallthru
    _
  // Predicated region
  $region34: #{classifier_forward.2} parent=0 // pred_check
    _
  $region35: #{classifier_forward.2} parent=0 // pred_check_branch
    %3495 = sbr.rel (0) target = $region37
  $region36: #{classifier_forward.2} parent=0 // pred_region
    _
  $region37: #{classifier_forward.2} parent=0 // pred_fallthru
    _
  // Predicated region
  $region38: #{classifier_forward.2} parent=0 // pred_check
    _
  $region39: #{classifier_forward.2} parent=0 // pred_check_branch
    %3497 = sbr.rel (0) target = $region41
  $region40: #{classifier_forward.2} parent=0 // pred_region
    _
  $region41: #{classifier_forward.2} parent=0 // pred_fallthru
    _

</llo_original>
